<compile_context>
chip_gen: v5e
topology: v5e:2x2
jax: 0.10.0
libtpu: 0.0.40
codegen_flags: <defaults>
</compile_context>

<pallas_src>
import functools

import jax
import jax.numpy as jnp
from jax.experimental import pallas as pl
from jax.experimental.pallas import tpu as pltpu


def _ecbam_kernel(we_ref, ws_ref, x_ref, o_ref, *,
                  C, W, HW, HWp, k_e, k_s, tb, cdt):
    """Fused ECA channel gate + spatial attention gate over one (tb, C, HWp) block."""
    f32 = jnp.float32
    pe = (k_e - 1) // 2
    ps = (k_s - 1) // 2
    spad = ps * W + ps                       # flattened 'same' pad: ps rows + ps cols
    inv_hw = 1.0 / HW                        # true H*W (pad columns of x are zero)
    inv_c = 1.0 / C

    # ---- hoisted loop-invariant constants (JAX does not CSE broadcast/iota) ----
    ones_hw = jnp.ones((HWp, 1), x_ref.dtype)          # MXU lane-reduce helper
    ones_c = jnp.ones((1, C), cdt)                     # MXU sublane-reduce helper
    col = jax.lax.broadcasted_iota(jnp.int32, (1, HWp), 1) % W
    col_masks = [jnp.logical_and(col + (dw - ps) >= 0, col + (dw - ps) < W)
                 for dw in range(k_s)]                 # column-wrap masks, per dw
    zc = jnp.zeros((pe, 1), f32) if pe > 0 else None
    zr = jnp.zeros((2, spad), f32) if spad > 0 else None
    w2 = ws_ref[...]                                   # (2, k_s*k_s) f32 SA weights
    prec_x = jax.lax.Precision.HIGHEST if x_ref.dtype == jnp.float32 else None
    prec_y = jax.lax.Precision.HIGHEST if cdt == jnp.float32 else None

    def process(b):
        xb = x_ref[b]                                  # (C, HWp) native dtype, no f32 copy

        # ---------------- ECA channel gate ----------------
        # Global avg pool = lane reduction -> offload to the MXU (f32 accumulate,
        # no cast of the block, no XLU pressure).  Zero pad columns contribute 0.
        avg_c = jnp.dot(xb, ones_hw, preferred_element_type=f32,
                        precision=prec_x) * inv_hw                  # (C, 1)
        avg_p = jnp.concatenate([zc, avg_c, zc], axis=0) if pe > 0 else avg_c
        conv_c = jnp.zeros((C, 1), f32)
        for j in range(k_e):                           # Conv1d taps (cross-correlation)
            conv_c = conv_c + we_ref[j] * avg_p[j:j + C]
        gate_c = jax.nn.sigmoid(conv_c)                              # (C, 1) f32
        y = xb.astype(cdt) * gate_c.astype(cdt)        # (C, HWp) heavy mul in cdt

        # ---------------- Spatial attention gate ----------------
        avg_s = jnp.dot(ones_c, y, preferred_element_type=f32,
                        precision=prec_y) * inv_c                    # (1, HWp) f32
        max_s = jnp.max(y, axis=0, keepdims=True).astype(f32)        # (1, HWp)
        maps = jnp.concatenate([avg_s, max_s], axis=0)               # (2, HWp) stacked
        maps_pp = jnp.concatenate([zr, maps, zr], axis=1) if spad > 0 else maps
        conv2 = jnp.zeros((2, HWp), f32)
        for dw in range(k_s):                          # one slice + one FMA per tap,
            acc = jnp.zeros((2, HWp), f32)             # shared by the avg & max channels
            for dh in range(k_s):
                start = dh * W + dw
                idx = dh * k_s + dw
                acc = acc + w2[:, idx:idx + 1] * maps_pp[:, start:start + HWp]
            conv2 = conv2 + jnp.where(col_masks[dw], acc, 0.0)
        conv_s = jnp.sum(conv2, axis=0, keepdims=True)               # (1, HWp)
        gate_s = jax.nn.sigmoid(conv_s)

        o_ref[b] = (y * gate_s.astype(cdt)).astype(o_ref.dtype)

    if tb == 1:
        process(0)                                     # static index, no loop
    else:
        # fori_loop (not a Python unroll) bounds the live range of the per-batch
        # f32 temporaries to a single batch and keeps code size independent of tb.
        jax.lax.fori_loop(0, tb, lambda b, _: process(b), None)


def _compute_dtype(x_dtype):
    """bf16 elementwise math only where the VPU/EUP support it (v6e and newer);
    on v5e and older keep in-kernel math in f32 (still streaming bf16 from HBM)."""
    if jnp.dtype(x_dtype) != jnp.dtype(jnp.bfloat16):
        return jnp.float32
    kind = jax.devices()[0].device_kind.lower()
    if any(tag in kind for tag in ("v2", "v3", "v4", "v5")):
        return jnp.float32
    return jnp.bfloat16


def _pick_batch_tile(batch, per_batch_bytes, per_batch_f32_bytes,
                     target_bytes=8 << 20, vmem_budget=44 << 20):
    """Largest divisor of `batch` packing blocks up to ~8 MiB (amortize the
    ~0.35 us/step overhead), with double-buffered in/out blocks + live per-batch
    f32 temporaries under a 44 MiB budget (headroom below v7x's 64 MiB VMEM),
    while keeping the grid >= 4 steps (even when batch allows) so both v7x
    TensorCores stay busy and balanced."""
    best = 1
    for tb in range(1, batch + 1):
        if batch % tb:
            continue
        if tb > 1:
            if tb * per_batch_bytes > target_bytes:
                break
            if 4 * tb * per_batch_bytes + 6 * per_batch_f32_bytes + (2 << 20) > vmem_budget:
                break
        steps = batch // tb
        if batch >= 2 and steps < 2:
            continue
        if batch >= 4 and steps < 4:
            continue
        if batch >= 8 and steps % 2:
            continue
        best = tb
    return best


@functools.partial(jax.jit, static_argnames=("eca_kernel_size", "sa_kernel_size"))
def ecbam_forward(x, w_eca, w_sa, *, eca_kernel_size, sa_kernel_size):
    """ECBAM forward.  x: (B,C,H,W).  w_eca: (k_e,) = Conv1d(1,1,k_e) weight.
    w_sa: (2,k_s,k_s) = Conv2d(2,1,k_s) weight with the out-channel squeezed."""
    B, C, H, W = x.shape
    k_e, k_s = eca_kernel_size, sa_kernel_size
    HW = H * W
    HWp = ((HW + 127) // 128) * 128            # lane-dense H*W axis (unmasked vst)
    itemsize = jnp.dtype(x.dtype).itemsize
    cdt = _compute_dtype(x.dtype)

    # Flatten NCHW -> (B, C, HWp): the heavy stream is lane-dense along H*W.
    x3 = x.reshape(B, C, HW)
    if HWp != HW:
        x3 = jnp.pad(x3, ((0, 0), (0, 0), (0, HWp - HW)))   # zero pad, handled in-kernel

    # TODO(synk): for huge C*H*W (single-batch block exceeding the VMEM budget) a
    # channel-halo tiling of the spatial conv would be the next step; not needed here.
    tb = _pick_batch_tile(B, C * HWp * itemsize, C * HWp * 4)
    grid = (B // tb,)

    we = w_eca.reshape(-1).astype(jnp.float32)               # (k_e,) -> SMEM scalars
    ws2 = w_sa.reshape(2, k_s * k_s).astype(jnp.float32)     # (2, k_s*k_s) -> VMEM

    block_bytes = tb * C * HWp * itemsize
    f32_batch = C * HWp * 4
    # Double-buffered in/out blocks + live per-batch temporaries + headroom,
    # capped at 48 MiB so the budget stays below v7x's 64 MiB physical VMEM.
    vmem_limit = int(min(48 << 20,
                         max(16 << 20, 4 * block_bytes + 6 * f32_batch + (2 << 20))))

    cost = pl.CostEstimate(
        flops=int(B * C * HWp * 5 + B * HWp * 4 * k_s * k_s + B * C * 2 * k_e),
        transcendentals=int(B * (C + HWp)),
        bytes_accessed=int(2 * B * C * HWp * itemsize + 4 * (we.size + ws2.size)),
    )

    kernel = functools.partial(_ecbam_kernel, C=C, W=W, HW=HW, HWp=HWp,
                               k_e=k_e, k_s=k_s, tb=tb, cdt=cdt)

    out3 = pl.pallas_call(
        kernel,
        out_shape=jax.ShapeDtypeStruct((B, C, HWp), x.dtype),
        grid=grid,
        in_specs=[
            pl.BlockSpec(memory_space=pltpu.SMEM),              # ECA Conv1d taps
            pl.BlockSpec((2, k_s * k_s), lambda i: (0, 0)),     # SA Conv2d weights (VMEM)
            pl.BlockSpec((tb, C, HWp), lambda i: (i, 0, 0)),    # x, tb batches / step
        ],
        out_specs=pl.BlockSpec((tb, C, HWp), lambda i: (i, 0, 0)),
        # No input_output_aliases: without buffer donation XLA would insert a
        # defensive full copy of x (extra HBM read+write) just to honor the alias.
        compiler_params=pltpu.CompilerParams(
            dimension_semantics=("parallel",),
            vmem_limit_bytes=vmem_limit),
        cost_estimate=cost,
    )(we, ws2, x3)

    if HWp != HW:
        out3 = out3[:, :, :HW]
    return out3.reshape(B, C, H, W)


def ecbam_reference(x, w_eca, w_sa, eca_kernel_size, sa_kernel_size):
    """Pure-JAX reference matching the PyTorch ECBAM module (f32 math)."""
    B, C, H, W = x.shape
    k_e, k_s = eca_kernel_size, sa_kernel_size
    pe, ps = (k_e - 1) // 2, (k_s - 1) // 2
    xf = x.astype(jnp.float32)
    w_eca = w_eca.astype(jnp.float32)
    w_sa = w_sa.astype(jnp.float32)

    # ECA_layer: global avg pool -> 1-D channel conv -> sigmoid -> channel gate.
    avg_c = jnp.mean(xf, axis=(2, 3))                            # (B, C)
    avg_p = jnp.pad(avg_c, ((0, 0), (pe, pe)))
    conv_c = sum(w_eca[j] * avg_p[:, j:j + C] for j in range(k_e))
    gate_c = jax.nn.sigmoid(conv_c)
    y = xf * gate_c[:, :, None, None]

    # SpatialAttention: channel mean/max -> 2-D conv -> sigmoid -> spatial gate.
    avg_s = jnp.mean(y, axis=1)                                  # (B, H, W)
    max_s = jnp.max(y, axis=1)
    ap = jnp.pad(avg_s, ((0, 0), (ps, ps), (ps, ps)))
    mp = jnp.pad(max_s, ((0, 0), (ps, ps), (ps, ps)))
    conv_s = jnp.zeros((B, H, W), jnp.float32)
    for dh in range(k_s):
        for dw in range(k_s):
            conv_s = conv_s + w_sa[0, dh, dw] * ap[:, dh:dh + H, dw:dw + W] \
                            + w_sa[1, dh, dw] * mp[:, dh:dh + H, dw:dw + W]
    gate_s = jax.nn.sigmoid(conv_s)
    return (y * gate_s[:, None, :, :]).astype(x.dtype)


if __name__ == "__main__":
    k_e, k_s = 3, 7
    key = jax.random.PRNGKey(0)
    kx, kx2, kx3, ke, ks = jax.random.split(key, 5)
    # PyTorch-style uniform init for Conv1d(1,1,k_e) and Conv2d(2,1,k_s) weights.
    be = 1.0 / (1 * k_e) ** 0.5
    bs = 1.0 / (2 * k_s * k_s) ** 0.5
    w_eca = jax.random.uniform(ke, (k_e,), jnp.float32, -be, be)
    w_sa = jax.random.uniform(ks, (2, k_s, k_s), jnp.float32, -bs, bs)

    # 1) f32, lane-aligned H*W (16*16 = 256).
    x = jax.random.normal(kx, (2, 8, 16, 16), jnp.float32)
    out = jax.block_until_ready(
        ecbam_forward(x, w_eca, w_sa, eca_kernel_size=k_e, sa_kernel_size=k_s))
    ref = ecbam_reference(x, w_eca, w_sa, k_e, k_s)
    assert out.shape == x.shape and out.dtype == x.dtype
    assert jnp.allclose(out, ref, rtol=1e-4, atol=1e-4), "f32 mismatch vs reference"

    # 2) bf16 streaming (bf16 elementwise math on v6e+/v7x, f32 math on v5e).
    x16 = jax.random.normal(kx2, (2, 8, 16, 16), jnp.float32).astype(jnp.bfloat16)
    out16 = jax.block_until_ready(
        ecbam_forward(x16, w_eca, w_sa, eca_kernel_size=k_e, sa_kernel_size=k_s))
    ref16 = ecbam_reference(x16.astype(jnp.float32), w_eca, w_sa, k_e, k_s)
    assert out16.dtype == jnp.bfloat16
    assert jnp.allclose(out16.astype(jnp.float32), ref16, rtol=2e-2, atol=2e-2), \
        "bf16 mismatch vs reference"

    # 3) non-multiple-of-128 H*W (14*14 = 196 -> padded to 256) + tb>1 fori_loop path.
    x14 = jax.random.normal(kx3, (16, 8, 14, 14), jnp.float32)
    out14 = jax.block_until_ready(
        ecbam_forward(x14, w_eca, w_sa, eca_kernel_size=k_e, sa_kernel_size=k_s))
    ref14 = ecbam_reference(x14, w_eca, w_sa, k_e, k_s)
    assert jnp.allclose(out14, ref14, rtol=1e-4, atol=1e-4), "padded-HW mismatch vs ref"

    print("KERNEL_OK")
</pallas_src>

<mosaic_0001>
module attributes {stable_mosaic.version = 11 : i64} {
  func.func @_ecbam_kernel(%arg0: i32, %arg1: memref<3xf32, #tpu.memory_space<smem>>, %arg2: memref<2x49xf32, #tpu.memory_space<vmem>>, %arg3: memref<1x8x256xf32, #tpu.memory_space<vmem>>, %arg4: memref<1x8x256xf32, #tpu.memory_space<vmem>>) attributes {dimension_semantics = [#tpu.dimension_semantics<parallel>], iteration_bounds = array<i64: 2>, scalar_prefetch = 0 : i64, scratch_operands = 0 : i64, tpu.core_type = #tpu.core_type<tc>, window_params = [{transform_indices = @transform_0, window_bounds = array<i64: 3>}, {pipeline_mode = #tpu.pipeline_mode<synchronous>, transform_indices = @transform_1, window_bounds = array<i64: 2, 49>}, {transform_indices = @transform_2, window_bounds = array<i64: 1, 8, 256>}, {transform_indices = @transform_3, window_bounds = array<i64: 1, 8, 256>}]} {
    %cst = arith.constant 1.000000e+00 : f32
    %0 = vector.broadcast %cst : f32 to vector<256x1xf32>
    %cst_0 = arith.constant 1.000000e+00 : f32
    %1 = vector.broadcast %cst_0 : f32 to vector<1x8xf32>
    %2 = tpu.iota {dimensions = array<i32: 1>} : vector<1x256xi32>
    %c16_i32 = arith.constant 16 : i32
    %c0_i32 = arith.constant 0 : i32
    %3 = arith.cmpi eq, %c16_i32, %c0_i32 : i32
    %c1_i32 = arith.constant 1 : i32
    %4 = arith.select %3, %c1_i32, %c16_i32 : i32
    %5 = vector.broadcast %4 : i32 to vector<1x256xi32>
    %6 = arith.remsi %2, %5 : vector<1x256xi32>
    %c0_i32_1 = arith.constant 0 : i32
    %7 = vector.broadcast %c0_i32_1 : i32 to vector<1x256xi32>
    %8 = arith.cmpi ne, %6, %7 : vector<1x256xi32>
    %c0_i32_2 = arith.constant 0 : i32
    %9 = vector.broadcast %c0_i32_2 : i32 to vector<1x256xi32>
    %10 = arith.cmpi slt, %6, %9 : vector<1x256xi32>
    %c0_i32_3 = arith.constant 0 : i32
    %11 = arith.cmpi slt, %4, %c0_i32_3 : i32
    %12 = vector.broadcast %11 : i1 to vector<1x256xi1>
    %13 = vector.broadcast %12 : vector<1x256xi1> to vector<1x256xi1>
    %14 = arith.xori %10, %13 : vector<1x256xi1>
    %15 = arith.andi %14, %8 : vector<1x256xi1>
    %16 = vector.broadcast %4 : i32 to vector<1x256xi32>
    %17 = arith.addi %6, %16 : vector<1x256xi32>
    %18 = arith.select %15, %17, %6 : vector<1x256xi1>, vector<1x256xi32>
    %c-3_i32 = arith.constant -3 : i32
    %19 = vector.broadcast %c-3_i32 : i32 to vector<1x256xi32>
    %20 = arith.addi %18, %19 : vector<1x256xi32>
    %c0_i32_4 = arith.constant 0 : i32
    %21 = vector.broadcast %c0_i32_4 : i32 to vector<1x256xi32>
    %22 = arith.cmpi sge, %20, %21 : vector<1x256xi32>
    %c-3_i32_5 = arith.constant -3 : i32
    %23 = vector.broadcast %c-3_i32_5 : i32 to vector<1x256xi32>
    %24 = arith.addi %18, %23 : vector<1x256xi32>
    %c16_i32_6 = arith.constant 16 : i32
    %25 = vector.broadcast %c16_i32_6 : i32 to vector<1x256xi32>
    %26 = arith.cmpi slt, %24, %25 : vector<1x256xi32>
    %27 = arith.andi %22, %26 : vector<1x256xi1>
    %c-2_i32 = arith.constant -2 : i32
    %28 = vector.broadcast %c-2_i32 : i32 to vector<1x256xi32>
    %29 = arith.addi %18, %28 : vector<1x256xi32>
    %c0_i32_7 = arith.constant 0 : i32
    %30 = vector.broadcast %c0_i32_7 : i32 to vector<1x256xi32>
    %31 = arith.cmpi sge, %29, %30 : vector<1x256xi32>
    %c-2_i32_8 = arith.constant -2 : i32
    %32 = vector.broadcast %c-2_i32_8 : i32 to vector<1x256xi32>
    %33 = arith.addi %18, %32 : vector<1x256xi32>
    %c16_i32_9 = arith.constant 16 : i32
    %34 = vector.broadcast %c16_i32_9 : i32 to vector<1x256xi32>
    %35 = arith.cmpi slt, %33, %34 : vector<1x256xi32>
    %36 = arith.andi %31, %35 : vector<1x256xi1>
    %c-1_i32 = arith.constant -1 : i32
    %37 = vector.broadcast %c-1_i32 : i32 to vector<1x256xi32>
    %38 = arith.addi %18, %37 : vector<1x256xi32>
    %c0_i32_10 = arith.constant 0 : i32
    %39 = vector.broadcast %c0_i32_10 : i32 to vector<1x256xi32>
    %40 = arith.cmpi sge, %38, %39 : vector<1x256xi32>
    %c-1_i32_11 = arith.constant -1 : i32
    %41 = vector.broadcast %c-1_i32_11 : i32 to vector<1x256xi32>
    %42 = arith.addi %18, %41 : vector<1x256xi32>
    %c16_i32_12 = arith.constant 16 : i32
    %43 = vector.broadcast %c16_i32_12 : i32 to vector<1x256xi32>
    %44 = arith.cmpi slt, %42, %43 : vector<1x256xi32>
    %45 = arith.andi %40, %44 : vector<1x256xi1>
    %c0_i32_13 = arith.constant 0 : i32
    %46 = vector.broadcast %c0_i32_13 : i32 to vector<1x256xi32>
    %47 = arith.addi %18, %46 : vector<1x256xi32>
    %c0_i32_14 = arith.constant 0 : i32
    %48 = vector.broadcast %c0_i32_14 : i32 to vector<1x256xi32>
    %49 = arith.cmpi sge, %47, %48 : vector<1x256xi32>
    %c0_i32_15 = arith.constant 0 : i32
    %50 = vector.broadcast %c0_i32_15 : i32 to vector<1x256xi32>
    %51 = arith.addi %18, %50 : vector<1x256xi32>
    %c16_i32_16 = arith.constant 16 : i32
    %52 = vector.broadcast %c16_i32_16 : i32 to vector<1x256xi32>
    %53 = arith.cmpi slt, %51, %52 : vector<1x256xi32>
    %54 = arith.andi %49, %53 : vector<1x256xi1>
    %c1_i32_17 = arith.constant 1 : i32
    %55 = vector.broadcast %c1_i32_17 : i32 to vector<1x256xi32>
    %56 = arith.addi %18, %55 : vector<1x256xi32>
    %c0_i32_18 = arith.constant 0 : i32
    %57 = vector.broadcast %c0_i32_18 : i32 to vector<1x256xi32>
    %58 = arith.cmpi sge, %56, %57 : vector<1x256xi32>
    %c1_i32_19 = arith.constant 1 : i32
    %59 = vector.broadcast %c1_i32_19 : i32 to vector<1x256xi32>
    %60 = arith.addi %18, %59 : vector<1x256xi32>
    %c16_i32_20 = arith.constant 16 : i32
    %61 = vector.broadcast %c16_i32_20 : i32 to vector<1x256xi32>
    %62 = arith.cmpi slt, %60, %61 : vector<1x256xi32>
    %63 = arith.andi %58, %62 : vector<1x256xi1>
    %c2_i32 = arith.constant 2 : i32
    %64 = vector.broadcast %c2_i32 : i32 to vector<1x256xi32>
    %65 = arith.addi %18, %64 : vector<1x256xi32>
    %c0_i32_21 = arith.constant 0 : i32
    %66 = vector.broadcast %c0_i32_21 : i32 to vector<1x256xi32>
    %67 = arith.cmpi sge, %65, %66 : vector<1x256xi32>
    %c2_i32_22 = arith.constant 2 : i32
    %68 = vector.broadcast %c2_i32_22 : i32 to vector<1x256xi32>
    %69 = arith.addi %18, %68 : vector<1x256xi32>
    %c16_i32_23 = arith.constant 16 : i32
    %70 = vector.broadcast %c16_i32_23 : i32 to vector<1x256xi32>
    %71 = arith.cmpi slt, %69, %70 : vector<1x256xi32>
    %72 = arith.andi %67, %71 : vector<1x256xi1>
    %c3_i32 = arith.constant 3 : i32
    %73 = vector.broadcast %c3_i32 : i32 to vector<1x256xi32>
    %74 = arith.addi %18, %73 : vector<1x256xi32>
    %c0_i32_24 = arith.constant 0 : i32
    %75 = vector.broadcast %c0_i32_24 : i32 to vector<1x256xi32>
    %76 = arith.cmpi sge, %74, %75 : vector<1x256xi32>
    %c3_i32_25 = arith.constant 3 : i32
    %77 = vector.broadcast %c3_i32_25 : i32 to vector<1x256xi32>
    %78 = arith.addi %18, %77 : vector<1x256xi32>
    %c16_i32_26 = arith.constant 16 : i32
    %79 = vector.broadcast %c16_i32_26 : i32 to vector<1x256xi32>
    %80 = arith.cmpi slt, %78, %79 : vector<1x256xi32>
    %81 = arith.andi %76, %80 : vector<1x256xi1>
    %cst_27 = arith.constant 0.000000e+00 : f32
    %82 = vector.broadcast %cst_27 : f32 to vector<1x1xf32>
    %cst_28 = arith.constant 0.000000e+00 : f32
    %83 = vector.broadcast %cst_28 : f32 to vector<2x51xf32>
    %c0 = arith.constant 0 : index
    %c0_29 = arith.constant 0 : index
    %84 = vector.load %arg2[%c0, %c0_29] : memref<2x49xf32, #tpu.memory_space<vmem>>, vector<2x49xf32>
    %c0_30 = arith.constant 0 : index
    %c0_31 = arith.constant 0 : index
    %c0_32 = arith.constant 0 : index
    %85 = vector.load %arg3[%c0_30, %c0_31, %c0_32] : memref<1x8x256xf32, #tpu.memory_space<vmem>>, vector<1x8x256xf32>
    %86 = vector.shape_cast %85 : vector<1x8x256xf32> to vector<8x256xf32>
    %cst_33 = arith.constant dense<0.000000e+00> : vector<8x1xf32>
    %87 = tpu.matmul %86, %0, %cst_33 {dimension_numbers = #tpu.dot_dimension_numbers<[1], [0], [0], [1], [0, 0, 1, 1], [], []>, precision = #tpu.contract_precision<fp32>} : vector<8x256xf32>, vector<256x1xf32>, vector<8x1xf32> -> vector<8x1xf32>
    %cst_34 = arith.constant 3.906250e-03 : f32
    %88 = vector.broadcast %cst_34 : f32 to vector<8x1xf32>
    %89 = arith.mulf %87, %88 : vector<8x1xf32>
    %90 = tpu.concatenate %82, %89, %82 in 0 : vector<1x1xf32>, vector<8x1xf32>, vector<1x1xf32> -> vector<10x1xf32>
    %cst_35 = arith.constant 0.000000e+00 : f32
    %91 = vector.broadcast %cst_35 : f32 to vector<8x1xf32>
    %c0_36 = arith.constant 0 : index
    %92 = memref.load %arg1[%c0_36] : memref<3xf32, #tpu.memory_space<smem>>
    %93 = vector.extract_strided_slice %90 {offsets = [0, 0], sizes = [8, 1], strides = [1, 1]} : vector<10x1xf32> to vector<8x1xf32>
    %94 = vector.broadcast %92 : f32 to vector<8x1xf32>
    %95 = arith.mulf %94, %93 : vector<8x1xf32>
    %96 = arith.addf %91, %95 : vector<8x1xf32>
    %c1 = arith.constant 1 : index
    %97 = memref.load %arg1[%c1] : memref<3xf32, #tpu.memory_space<smem>>
    %98 = vector.extract_strided_slice %90 {offsets = [1, 0], sizes = [8, 1], strides = [1, 1]} : vector<10x1xf32> to vector<8x1xf32>
    %99 = vector.broadcast %97 : f32 to vector<8x1xf32>
    %100 = arith.mulf %99, %98 : vector<8x1xf32>
    %101 = arith.addf %96, %100 : vector<8x1xf32>
    %c2 = arith.constant 2 : index
    %102 = memref.load %arg1[%c2] : memref<3xf32, #tpu.memory_space<smem>>
    %103 = vector.extract_strided_slice %90 {offsets = [2, 0], sizes = [8, 1], strides = [1, 1]} : vector<10x1xf32> to vector<8x1xf32>
    %104 = vector.broadcast %102 : f32 to vector<8x1xf32>
    %105 = arith.mulf %104, %103 : vector<8x1xf32>
    %106 = arith.addf %101, %105 : vector<8x1xf32>
    %107 = arith.negf %106 : vector<8x1xf32>
    %108 = math.exp %107 : vector<8x1xf32>
    %cst_37 = arith.constant 1.000000e+00 : f32
    %109 = vector.broadcast %cst_37 : f32 to vector<8x1xf32>
    %110 = arith.addf %109, %108 : vector<8x1xf32>
    %111 = arith.divf %109, %110 : vector<8x1xf32>
    %112 = vector.broadcast %111 : vector<8x1xf32> to vector<8x256xf32>
    %113 = arith.mulf %86, %112 : vector<8x256xf32>
    %cst_38 = arith.constant dense<0.000000e+00> : vector<1x256xf32>
    %114 = tpu.matmul %1, %113, %cst_38 {dimension_numbers = #tpu.dot_dimension_numbers<[1], [0], [0], [1], [0, 0, 1, 1], [], []>, precision = #tpu.contract_precision<fp32>} : vector<1x8xf32>, vector<8x256xf32>, vector<1x256xf32> -> vector<1x256xf32>
    %cst_39 = arith.constant 1.250000e-01 : f32
    %115 = vector.broadcast %cst_39 : f32 to vector<1x256xf32>
    %116 = arith.mulf %114, %115 : vector<1x256xf32>
    %cst_40 = arith.constant dense<0xFF800000> : vector<256xf32>
    %117 = vector.multi_reduction <maximumf>, %113, %cst_40 [0] : vector<8x256xf32> to vector<256xf32>
    %118 = vector.shape_cast %117 : vector<256xf32> to vector<1x256xf32>
    %119 = tpu.concatenate %116, %118 in 0 : vector<1x256xf32>, vector<1x256xf32> -> vector<2x256xf32>
    %120 = tpu.concatenate %83, %119, %83 in 1 : vector<2x51xf32>, vector<2x256xf32>, vector<2x51xf32> -> vector<2x358xf32>
    %cst_41 = arith.constant 0.000000e+00 : f32
    %121 = vector.broadcast %cst_41 : f32 to vector<2x256xf32>
    %cst_42 = arith.constant 0.000000e+00 : f32
    %122 = vector.broadcast %cst_42 : f32 to vector<2x256xf32>
    %123 = vector.extract_strided_slice %84 {offsets = [0, 0], sizes = [2, 1], strides = [1, 1]} : vector<2x49xf32> to vector<2x1xf32>
    %124 = vector.extract_strided_slice %120 {offsets = [0, 0], sizes = [2, 256], strides = [1, 1]} : vector<2x358xf32> to vector<2x256xf32>
    %125 = vector.broadcast %123 : vector<2x1xf32> to vector<2x256xf32>
    %126 = arith.mulf %125, %124 : vector<2x256xf32>
    %127 = arith.addf %122, %126 : vector<2x256xf32>
    %128 = vector.extract_strided_slice %84 {offsets = [0, 7], sizes = [2, 1], strides = [1, 1]} : vector<2x49xf32> to vector<2x1xf32>
    %129 = vector.extract_strided_slice %120 {offsets = [0, 16], sizes = [2, 256], strides = [1, 1]} : vector<2x358xf32> to vector<2x256xf32>
    %130 = vector.broadcast %128 : vector<2x1xf32> to vector<2x256xf32>
    %131 = arith.mulf %130, %129 : vector<2x256xf32>
    %132 = arith.addf %127, %131 : vector<2x256xf32>
    %133 = vector.extract_strided_slice %84 {offsets = [0, 14], sizes = [2, 1], strides = [1, 1]} : vector<2x49xf32> to vector<2x1xf32>
    %134 = vector.extract_strided_slice %120 {offsets = [0, 32], sizes = [2, 256], strides = [1, 1]} : vector<2x358xf32> to vector<2x256xf32>
    %135 = vector.broadcast %133 : vector<2x1xf32> to vector<2x256xf32>
    %136 = arith.mulf %135, %134 : vector<2x256xf32>
    %137 = arith.addf %132, %136 : vector<2x256xf32>
    %138 = vector.extract_strided_slice %84 {offsets = [0, 21], sizes = [2, 1], strides = [1, 1]} : vector<2x49xf32> to vector<2x1xf32>
    %139 = vector.extract_strided_slice %120 {offsets = [0, 48], sizes = [2, 256], strides = [1, 1]} : vector<2x358xf32> to vector<2x256xf32>
    %140 = vector.broadcast %138 : vector<2x1xf32> to vector<2x256xf32>
    %141 = arith.mulf %140, %139 : vector<2x256xf32>
    %142 = arith.addf %137, %141 : vector<2x256xf32>
    %143 = vector.extract_strided_slice %84 {offsets = [0, 28], sizes = [2, 1], strides = [1, 1]} : vector<2x49xf32> to vector<2x1xf32>
    %144 = vector.extract_strided_slice %120 {offsets = [0, 64], sizes = [2, 256], strides = [1, 1]} : vector<2x358xf32> to vector<2x256xf32>
    %145 = vector.broadcast %143 : vector<2x1xf32> to vector<2x256xf32>
    %146 = arith.mulf %145, %144 : vector<2x256xf32>
    %147 = arith.addf %142, %146 : vector<2x256xf32>
    %148 = vector.extract_strided_slice %84 {offsets = [0, 35], sizes = [2, 1], strides = [1, 1]} : vector<2x49xf32> to vector<2x1xf32>
    %149 = vector.extract_strided_slice %120 {offsets = [0, 80], sizes = [2, 256], strides = [1, 1]} : vector<2x358xf32> to vector<2x256xf32>
    %150 = vector.broadcast %148 : vector<2x1xf32> to vector<2x256xf32>
    %151 = arith.mulf %150, %149 : vector<2x256xf32>
    %152 = arith.addf %147, %151 : vector<2x256xf32>
    %153 = vector.extract_strided_slice %84 {offsets = [0, 42], sizes = [2, 1], strides = [1, 1]} : vector<2x49xf32> to vector<2x1xf32>
    %154 = vector.extract_strided_slice %120 {offsets = [0, 96], sizes = [2, 256], strides = [1, 1]} : vector<2x358xf32> to vector<2x256xf32>
    %155 = vector.broadcast %153 : vector<2x1xf32> to vector<2x256xf32>
    %156 = arith.mulf %155, %154 : vector<2x256xf32>
    %157 = arith.addf %152, %156 : vector<2x256xf32>
    %cst_43 = arith.constant 0.000000e+00 : f32
    %158 = vector.shape_cast %27 : vector<1x256xi1> to vector<1x256xi1>
    %159 = vector.broadcast %158 : vector<1x256xi1> to vector<2x256xi1>
    %160 = vector.broadcast %cst_43 : f32 to vector<2x256xf32>
    %161 = arith.select %159, %157, %160 : vector<2x256xi1>, vector<2x256xf32>
    %162 = arith.addf %121, %161 : vector<2x256xf32>
    %cst_44 = arith.constant 0.000000e+00 : f32
    %163 = vector.broadcast %cst_44 : f32 to vector<2x256xf32>
    %164 = vector.extract_strided_slice %84 {offsets = [0, 1], sizes = [2, 1], strides = [1, 1]} : vector<2x49xf32> to vector<2x1xf32>
    %165 = vector.extract_strided_slice %120 {offsets = [0, 1], sizes = [2, 256], strides = [1, 1]} : vector<2x358xf32> to vector<2x256xf32>
    %166 = vector.broadcast %164 : vector<2x1xf32> to vector<2x256xf32>
    %167 = arith.mulf %166, %165 : vector<2x256xf32>
    %168 = arith.addf %163, %167 : vector<2x256xf32>
    %169 = vector.extract_strided_slice %84 {offsets = [0, 8], sizes = [2, 1], strides = [1, 1]} : vector<2x49xf32> to vector<2x1xf32>
    %170 = vector.extract_strided_slice %120 {offsets = [0, 17], sizes = [2, 256], strides = [1, 1]} : vector<2x358xf32> to vector<2x256xf32>
    %171 = vector.broadcast %169 : vector<2x1xf32> to vector<2x256xf32>
    %172 = arith.mulf %171, %170 : vector<2x256xf32>
    %173 = arith.addf %168, %172 : vector<2x256xf32>
    %174 = vector.extract_strided_slice %84 {offsets = [0, 15], sizes = [2, 1], strides = [1, 1]} : vector<2x49xf32> to vector<2x1xf32>
    %175 = vector.extract_strided_slice %120 {offsets = [0, 33], sizes = [2, 256], strides = [1, 1]} : vector<2x358xf32> to vector<2x256xf32>
    %176 = vector.broadcast %174 : vector<2x1xf32> to vector<2x256xf32>
    %177 = arith.mulf %176, %175 : vector<2x256xf32>
    %178 = arith.addf %173, %177 : vector<2x256xf32>
    %179 = vector.extract_strided_slice %84 {offsets = [0, 22], sizes = [2, 1], strides = [1, 1]} : vector<2x49xf32> to vector<2x1xf32>
    %180 = vector.extract_strided_slice %120 {offsets = [0, 49], sizes = [2, 256], strides = [1, 1]} : vector<2x358xf32> to vector<2x256xf32>
    %181 = vector.broadcast %179 : vector<2x1xf32> to vector<2x256xf32>
    %182 = arith.mulf %181, %180 : vector<2x256xf32>
    %183 = arith.addf %178, %182 : vector<2x256xf32>
    %184 = vector.extract_strided_slice %84 {offsets = [0, 29], sizes = [2, 1], strides = [1, 1]} : vector<2x49xf32> to vector<2x1xf32>
    %185 = vector.extract_strided_slice %120 {offsets = [0, 65], sizes = [2, 256], strides = [1, 1]} : vector<2x358xf32> to vector<2x256xf32>
    %186 = vector.broadcast %184 : vector<2x1xf32> to vector<2x256xf32>
    %187 = arith.mulf %186, %185 : vector<2x256xf32>
    %188 = arith.addf %183, %187 : vector<2x256xf32>
    %189 = vector.extract_strided_slice %84 {offsets = [0, 36], sizes = [2, 1], strides = [1, 1]} : vector<2x49xf32> to vector<2x1xf32>
    %190 = vector.extract_strided_slice %120 {offsets = [0, 81], sizes = [2, 256], strides = [1, 1]} : vector<2x358xf32> to vector<2x256xf32>
    %191 = vector.broadcast %189 : vector<2x1xf32> to vector<2x256xf32>
    %192 = arith.mulf %191, %190 : vector<2x256xf32>
    %193 = arith.addf %188, %192 : vector<2x256xf32>
    %194 = vector.extract_strided_slice %84 {offsets = [0, 43], sizes = [2, 1], strides = [1, 1]} : vector<2x49xf32> to vector<2x1xf32>
    %195 = vector.extract_strided_slice %120 {offsets = [0, 97], sizes = [2, 256], strides = [1, 1]} : vector<2x358xf32> to vector<2x256xf32>
    %196 = vector.broadcast %194 : vector<2x1xf32> to vector<2x256xf32>
    %197 = arith.mulf %196, %195 : vector<2x256xf32>
    %198 = arith.addf %193, %197 : vector<2x256xf32>
    %cst_45 = arith.constant 0.000000e+00 : f32
    %199 = vector.shape_cast %36 : vector<1x256xi1> to vector<1x256xi1>
    %200 = vector.broadcast %199 : vector<1x256xi1> to vector<2x256xi1>
    %201 = vector.broadcast %cst_45 : f32 to vector<2x256xf32>
    %202 = arith.select %200, %198, %201 : vector<2x256xi1>, vector<2x256xf32>
    %203 = arith.addf %162, %202 : vector<2x256xf32>
    %cst_46 = arith.constant 0.000000e+00 : f32
    %204 = vector.broadcast %cst_46 : f32 to vector<2x256xf32>
    %205 = vector.extract_strided_slice %84 {offsets = [0, 2], sizes = [2, 1], strides = [1, 1]} : vector<2x49xf32> to vector<2x1xf32>
    %206 = vector.extract_strided_slice %120 {offsets = [0, 2], sizes = [2, 256], strides = [1, 1]} : vector<2x358xf32> to vector<2x256xf32>
    %207 = vector.broadcast %205 : vector<2x1xf32> to vector<2x256xf32>
    %208 = arith.mulf %207, %206 : vector<2x256xf32>
    %209 = arith.addf %204, %208 : vector<2x256xf32>
    %210 = vector.extract_strided_slice %84 {offsets = [0, 9], sizes = [2, 1], strides = [1, 1]} : vector<2x49xf32> to vector<2x1xf32>
    %211 = vector.extract_strided_slice %120 {offsets = [0, 18], sizes = [2, 256], strides = [1, 1]} : vector<2x358xf32> to vector<2x256xf32>
    %212 = vector.broadcast %210 : vector<2x1xf32> to vector<2x256xf32>
    %213 = arith.mulf %212, %211 : vector<2x256xf32>
    %214 = arith.addf %209, %213 : vector<2x256xf32>
    %215 = vector.extract_strided_slice %84 {offsets = [0, 16], sizes = [2, 1], strides = [1, 1]} : vector<2x49xf32> to vector<2x1xf32>
    %216 = vector.extract_strided_slice %120 {offsets = [0, 34], sizes = [2, 256], strides = [1, 1]} : vector<2x358xf32> to vector<2x256xf32>
    %217 = vector.broadcast %215 : vector<2x1xf32> to vector<2x256xf32>
    %218 = arith.mulf %217, %216 : vector<2x256xf32>
    %219 = arith.addf %214, %218 : vector<2x256xf32>
    %220 = vector.extract_strided_slice %84 {offsets = [0, 23], sizes = [2, 1], strides = [1, 1]} : vector<2x49xf32> to vector<2x1xf32>
    %221 = vector.extract_strided_slice %120 {offsets = [0, 50], sizes = [2, 256], strides = [1, 1]} : vector<2x358xf32> to vector<2x256xf32>
    %222 = vector.broadcast %220 : vector<2x1xf32> to vector<2x256xf32>
    %223 = arith.mulf %222, %221 : vector<2x256xf32>
    %224 = arith.addf %219, %223 : vector<2x256xf32>
    %225 = vector.extract_strided_slice %84 {offsets = [0, 30], sizes = [2, 1], strides = [1, 1]} : vector<2x49xf32> to vector<2x1xf32>
    %226 = vector.extract_strided_slice %120 {offsets = [0, 66], sizes = [2, 256], strides = [1, 1]} : vector<2x358xf32> to vector<2x256xf32>
    %227 = vector.broadcast %225 : vector<2x1xf32> to vector<2x256xf32>
    %228 = arith.mulf %227, %226 : vector<2x256xf32>
    %229 = arith.addf %224, %228 : vector<2x256xf32>
    %230 = vector.extract_strided_slice %84 {offsets = [0, 37], sizes = [2, 1], strides = [1, 1]} : vector<2x49xf32> to vector<2x1xf32>
    %231 = vector.extract_strided_slice %120 {offsets = [0, 82], sizes = [2, 256], strides = [1, 1]} : vector<2x358xf32> to vector<2x256xf32>
    %232 = vector.broadcast %230 : vector<2x1xf32> to vector<2x256xf32>
    %233 = arith.mulf %232, %231 : vector<2x256xf32>
    %234 = arith.addf %229, %233 : vector<2x256xf32>
    %235 = vector.extract_strided_slice %84 {offsets = [0, 44], sizes = [2, 1], strides = [1, 1]} : vector<2x49xf32> to vector<2x1xf32>
    %236 = vector.extract_strided_slice %120 {offsets = [0, 98], sizes = [2, 256], strides = [1, 1]} : vector<2x358xf32> to vector<2x256xf32>
    %237 = vector.broadcast %235 : vector<2x1xf32> to vector<2x256xf32>
    %238 = arith.mulf %237, %236 : vector<2x256xf32>
    %239 = arith.addf %234, %238 : vector<2x256xf32>
    %cst_47 = arith.constant 0.000000e+00 : f32
    %240 = vector.shape_cast %45 : vector<1x256xi1> to vector<1x256xi1>
    %241 = vector.broadcast %240 : vector<1x256xi1> to vector<2x256xi1>
    %242 = vector.broadcast %cst_47 : f32 to vector<2x256xf32>
    %243 = arith.select %241, %239, %242 : vector<2x256xi1>, vector<2x256xf32>
    %244 = arith.addf %203, %243 : vector<2x256xf32>
    %cst_48 = arith.constant 0.000000e+00 : f32
    %245 = vector.broadcast %cst_48 : f32 to vector<2x256xf32>
    %246 = vector.extract_strided_slice %84 {offsets = [0, 3], sizes = [2, 1], strides = [1, 1]} : vector<2x49xf32> to vector<2x1xf32>
    %247 = vector.extract_strided_slice %120 {offsets = [0, 3], sizes = [2, 256], strides = [1, 1]} : vector<2x358xf32> to vector<2x256xf32>
    %248 = vector.broadcast %246 : vector<2x1xf32> to vector<2x256xf32>
    %249 = arith.mulf %248, %247 : vector<2x256xf32>
    %250 = arith.addf %245, %249 : vector<2x256xf32>
    %251 = vector.extract_strided_slice %84 {offsets = [0, 10], sizes = [2, 1], strides = [1, 1]} : vector<2x49xf32> to vector<2x1xf32>
    %252 = vector.extract_strided_slice %120 {offsets = [0, 19], sizes = [2, 256], strides = [1, 1]} : vector<2x358xf32> to vector<2x256xf32>
    %253 = vector.broadcast %251 : vector<2x1xf32> to vector<2x256xf32>
    %254 = arith.mulf %253, %252 : vector<2x256xf32>
    %255 = arith.addf %250, %254 : vector<2x256xf32>
    %256 = vector.extract_strided_slice %84 {offsets = [0, 17], sizes = [2, 1], strides = [1, 1]} : vector<2x49xf32> to vector<2x1xf32>
    %257 = vector.extract_strided_slice %120 {offsets = [0, 35], sizes = [2, 256], strides = [1, 1]} : vector<2x358xf32> to vector<2x256xf32>
    %258 = vector.broadcast %256 : vector<2x1xf32> to vector<2x256xf32>
    %259 = arith.mulf %258, %257 : vector<2x256xf32>
    %260 = arith.addf %255, %259 : vector<2x256xf32>
    %261 = vector.extract_strided_slice %84 {offsets = [0, 24], sizes = [2, 1], strides = [1, 1]} : vector<2x49xf32> to vector<2x1xf32>
    %262 = vector.extract_strided_slice %120 {offsets = [0, 51], sizes = [2, 256], strides = [1, 1]} : vector<2x358xf32> to vector<2x256xf32>
    %263 = vector.broadcast %261 : vector<2x1xf32> to vector<2x256xf32>
    %264 = arith.mulf %263, %262 : vector<2x256xf32>
    %265 = arith.addf %260, %264 : vector<2x256xf32>
    %266 = vector.extract_strided_slice %84 {offsets = [0, 31], sizes = [2, 1], strides = [1, 1]} : vector<2x49xf32> to vector<2x1xf32>
    %267 = vector.extract_strided_slice %120 {offsets = [0, 67], sizes = [2, 256], strides = [1, 1]} : vector<2x358xf32> to vector<2x256xf32>
    %268 = vector.broadcast %266 : vector<2x1xf32> to vector<2x256xf32>
    %269 = arith.mulf %268, %267 : vector<2x256xf32>
    %270 = arith.addf %265, %269 : vector<2x256xf32>
    %271 = vector.extract_strided_slice %84 {offsets = [0, 38], sizes = [2, 1], strides = [1, 1]} : vector<2x49xf32> to vector<2x1xf32>
    %272 = vector.extract_strided_slice %120 {offsets = [0, 83], sizes = [2, 256], strides = [1, 1]} : vector<2x358xf32> to vector<2x256xf32>
    %273 = vector.broadcast %271 : vector<2x1xf32> to vector<2x256xf32>
    %274 = arith.mulf %273, %272 : vector<2x256xf32>
    %275 = arith.addf %270, %274 : vector<2x256xf32>
    %276 = vector.extract_strided_slice %84 {offsets = [0, 45], sizes = [2, 1], strides = [1, 1]} : vector<2x49xf32> to vector<2x1xf32>
    %277 = vector.extract_strided_slice %120 {offsets = [0, 99], sizes = [2, 256], strides = [1, 1]} : vector<2x358xf32> to vector<2x256xf32>
    %278 = vector.broadcast %276 : vector<2x1xf32> to vector<2x256xf32>
    %279 = arith.mulf %278, %277 : vector<2x256xf32>
    %280 = arith.addf %275, %279 : vector<2x256xf32>
    %cst_49 = arith.constant 0.000000e+00 : f32
    %281 = vector.shape_cast %54 : vector<1x256xi1> to vector<1x256xi1>
    %282 = vector.broadcast %281 : vector<1x256xi1> to vector<2x256xi1>
    %283 = vector.broadcast %cst_49 : f32 to vector<2x256xf32>
    %284 = arith.select %282, %280, %283 : vector<2x256xi1>, vector<2x256xf32>
    %285 = arith.addf %244, %284 : vector<2x256xf32>
    %cst_50 = arith.constant 0.000000e+00 : f32
    %286 = vector.broadcast %cst_50 : f32 to vector<2x256xf32>
    %287 = vector.extract_strided_slice %84 {offsets = [0, 4], sizes = [2, 1], strides = [1, 1]} : vector<2x49xf32> to vector<2x1xf32>
    %288 = vector.extract_strided_slice %120 {offsets = [0, 4], sizes = [2, 256], strides = [1, 1]} : vector<2x358xf32> to vector<2x256xf32>
    %289 = vector.broadcast %287 : vector<2x1xf32> to vector<2x256xf32>
    %290 = arith.mulf %289, %288 : vector<2x256xf32>
    %291 = arith.addf %286, %290 : vector<2x256xf32>
    %292 = vector.extract_strided_slice %84 {offsets = [0, 11], sizes = [2, 1], strides = [1, 1]} : vector<2x49xf32> to vector<2x1xf32>
    %293 = vector.extract_strided_slice %120 {offsets = [0, 20], sizes = [2, 256], strides = [1, 1]} : vector<2x358xf32> to vector<2x256xf32>
    %294 = vector.broadcast %292 : vector<2x1xf32> to vector<2x256xf32>
    %295 = arith.mulf %294, %293 : vector<2x256xf32>
    %296 = arith.addf %291, %295 : vector<2x256xf32>
    %297 = vector.extract_strided_slice %84 {offsets = [0, 18], sizes = [2, 1], strides = [1, 1]} : vector<2x49xf32> to vector<2x1xf32>
    %298 = vector.extract_strided_slice %120 {offsets = [0, 36], sizes = [2, 256], strides = [1, 1]} : vector<2x358xf32> to vector<2x256xf32>
    %299 = vector.broadcast %297 : vector<2x1xf32> to vector<2x256xf32>
    %300 = arith.mulf %299, %298 : vector<2x256xf32>
    %301 = arith.addf %296, %300 : vector<2x256xf32>
    %302 = vector.extract_strided_slice %84 {offsets = [0, 25], sizes = [2, 1], strides = [1, 1]} : vector<2x49xf32> to vector<2x1xf32>
    %303 = vector.extract_strided_slice %120 {offsets = [0, 52], sizes = [2, 256], strides = [1, 1]} : vector<2x358xf32> to vector<2x256xf32>
    %304 = vector.broadcast %302 : vector<2x1xf32> to vector<2x256xf32>
    %305 = arith.mulf %304, %303 : vector<2x256xf32>
    %306 = arith.addf %301, %305 : vector<2x256xf32>
    %307 = vector.extract_strided_slice %84 {offsets = [0, 32], sizes = [2, 1], strides = [1, 1]} : vector<2x49xf32> to vector<2x1xf32>
    %308 = vector.extract_strided_slice %120 {offsets = [0, 68], sizes = [2, 256], strides = [1, 1]} : vector<2x358xf32> to vector<2x256xf32>
    %309 = vector.broadcast %307 : vector<2x1xf32> to vector<2x256xf32>
    %310 = arith.mulf %309, %308 : vector<2x256xf32>
    %311 = arith.addf %306, %310 : vector<2x256xf32>
    %312 = vector.extract_strided_slice %84 {offsets = [0, 39], sizes = [2, 1], strides = [1, 1]} : vector<2x49xf32> to vector<2x1xf32>
    %313 = vector.extract_strided_slice %120 {offsets = [0, 84], sizes = [2, 256], strides = [1, 1]} : vector<2x358xf32> to vector<2x256xf32>
    %314 = vector.broadcast %312 : vector<2x1xf32> to vector<2x256xf32>
    %315 = arith.mulf %314, %313 : vector<2x256xf32>
    %316 = arith.addf %311, %315 : vector<2x256xf32>
    %317 = vector.extract_strided_slice %84 {offsets = [0, 46], sizes = [2, 1], strides = [1, 1]} : vector<2x49xf32> to vector<2x1xf32>
    %318 = vector.extract_strided_slice %120 {offsets = [0, 100], sizes = [2, 256], strides = [1, 1]} : vector<2x358xf32> to vector<2x256xf32>
    %319 = vector.broadcast %317 : vector<2x1xf32> to vector<2x256xf32>
    %320 = arith.mulf %319, %318 : vector<2x256xf32>
    %321 = arith.addf %316, %320 : vector<2x256xf32>
    %cst_51 = arith.constant 0.000000e+00 : f32
    %322 = vector.shape_cast %63 : vector<1x256xi1> to vector<1x256xi1>
    %323 = vector.broadcast %322 : vector<1x256xi1> to vector<2x256xi1>
    %324 = vector.broadcast %cst_51 : f32 to vector<2x256xf32>
    %325 = arith.select %323, %321, %324 : vector<2x256xi1>, vector<2x256xf32>
    %326 = arith.addf %285, %325 : vector<2x256xf32>
    %cst_52 = arith.constant 0.000000e+00 : f32
    %327 = vector.broadcast %cst_52 : f32 to vector<2x256xf32>
    %328 = vector.extract_strided_slice %84 {offsets = [0, 5], sizes = [2, 1], strides = [1, 1]} : vector<2x49xf32> to vector<2x1xf32>
    %329 = vector.extract_strided_slice %120 {offsets = [0, 5], sizes = [2, 256], strides = [1, 1]} : vector<2x358xf32> to vector<2x256xf32>
    %330 = vector.broadcast %328 : vector<2x1xf32> to vector<2x256xf32>
    %331 = arith.mulf %330, %329 : vector<2x256xf32>
    %332 = arith.addf %327, %331 : vector<2x256xf32>
    %333 = vector.extract_strided_slice %84 {offsets = [0, 12], sizes = [2, 1], strides = [1, 1]} : vector<2x49xf32> to vector<2x1xf32>
    %334 = vector.extract_strided_slice %120 {offsets = [0, 21], sizes = [2, 256], strides = [1, 1]} : vector<2x358xf32> to vector<2x256xf32>
    %335 = vector.broadcast %333 : vector<2x1xf32> to vector<2x256xf32>
    %336 = arith.mulf %335, %334 : vector<2x256xf32>
    %337 = arith.addf %332, %336 : vector<2x256xf32>
    %338 = vector.extract_strided_slice %84 {offsets = [0, 19], sizes = [2, 1], strides = [1, 1]} : vector<2x49xf32> to vector<2x1xf32>
    %339 = vector.extract_strided_slice %120 {offsets = [0, 37], sizes = [2, 256], strides = [1, 1]} : vector<2x358xf32> to vector<2x256xf32>
    %340 = vector.broadcast %338 : vector<2x1xf32> to vector<2x256xf32>
    %341 = arith.mulf %340, %339 : vector<2x256xf32>
    %342 = arith.addf %337, %341 : vector<2x256xf32>
    %343 = vector.extract_strided_slice %84 {offsets = [0, 26], sizes = [2, 1], strides = [1, 1]} : vector<2x49xf32> to vector<2x1xf32>
    %344 = vector.extract_strided_slice %120 {offsets = [0, 53], sizes = [2, 256], strides = [1, 1]} : vector<2x358xf32> to vector<2x256xf32>
    %345 = vector.broadcast %343 : vector<2x1xf32> to vector<2x256xf32>
    %346 = arith.mulf %345, %344 : vector<2x256xf32>
    %347 = arith.addf %342, %346 : vector<2x256xf32>
    %348 = vector.extract_strided_slice %84 {offsets = [0, 33], sizes = [2, 1], strides = [1, 1]} : vector<2x49xf32> to vector<2x1xf32>
    %349 = vector.extract_strided_slice %120 {offsets = [0, 69], sizes = [2, 256], strides = [1, 1]} : vector<2x358xf32> to vector<2x256xf32>
    %350 = vector.broadcast %348 : vector<2x1xf32> to vector<2x256xf32>
    %351 = arith.mulf %350, %349 : vector<2x256xf32>
    %352 = arith.addf %347, %351 : vector<2x256xf32>
    %353 = vector.extract_strided_slice %84 {offsets = [0, 40], sizes = [2, 1], strides = [1, 1]} : vector<2x49xf32> to vector<2x1xf32>
    %354 = vector.extract_strided_slice %120 {offsets = [0, 85], sizes = [2, 256], strides = [1, 1]} : vector<2x358xf32> to vector<2x256xf32>
    %355 = vector.broadcast %353 : vector<2x1xf32> to vector<2x256xf32>
    %356 = arith.mulf %355, %354 : vector<2x256xf32>
    %357 = arith.addf %352, %356 : vector<2x256xf32>
    %358 = vector.extract_strided_slice %84 {offsets = [0, 47], sizes = [2, 1], strides = [1, 1]} : vector<2x49xf32> to vector<2x1xf32>
    %359 = vector.extract_strided_slice %120 {offsets = [0, 101], sizes = [2, 256], strides = [1, 1]} : vector<2x358xf32> to vector<2x256xf32>
    %360 = vector.broadcast %358 : vector<2x1xf32> to vector<2x256xf32>
    %361 = arith.mulf %360, %359 : vector<2x256xf32>
    %362 = arith.addf %357, %361 : vector<2x256xf32>
    %cst_53 = arith.constant 0.000000e+00 : f32
    %363 = vector.shape_cast %72 : vector<1x256xi1> to vector<1x256xi1>
    %364 = vector.broadcast %363 : vector<1x256xi1> to vector<2x256xi1>
    %365 = vector.broadcast %cst_53 : f32 to vector<2x256xf32>
    %366 = arith.select %364, %362, %365 : vector<2x256xi1>, vector<2x256xf32>
    %367 = arith.addf %326, %366 : vector<2x256xf32>
    %cst_54 = arith.constant 0.000000e+00 : f32
    %368 = vector.broadcast %cst_54 : f32 to vector<2x256xf32>
    %369 = vector.extract_strided_slice %84 {offsets = [0, 6], sizes = [2, 1], strides = [1, 1]} : vector<2x49xf32> to vector<2x1xf32>
    %370 = vector.extract_strided_slice %120 {offsets = [0, 6], sizes = [2, 256], strides = [1, 1]} : vector<2x358xf32> to vector<2x256xf32>
    %371 = vector.broadcast %369 : vector<2x1xf32> to vector<2x256xf32>
    %372 = arith.mulf %371, %370 : vector<2x256xf32>
    %373 = arith.addf %368, %372 : vector<2x256xf32>
    %374 = vector.extract_strided_slice %84 {offsets = [0, 13], sizes = [2, 1], strides = [1, 1]} : vector<2x49xf32> to vector<2x1xf32>
    %375 = vector.extract_strided_slice %120 {offsets = [0, 22], sizes = [2, 256], strides = [1, 1]} : vector<2x358xf32> to vector<2x256xf32>
    %376 = vector.broadcast %374 : vector<2x1xf32> to vector<2x256xf32>
    %377 = arith.mulf %376, %375 : vector<2x256xf32>
    %378 = arith.addf %373, %377 : vector<2x256xf32>
    %379 = vector.extract_strided_slice %84 {offsets = [0, 20], sizes = [2, 1], strides = [1, 1]} : vector<2x49xf32> to vector<2x1xf32>
    %380 = vector.extract_strided_slice %120 {offsets = [0, 38], sizes = [2, 256], strides = [1, 1]} : vector<2x358xf32> to vector<2x256xf32>
    %381 = vector.broadcast %379 : vector<2x1xf32> to vector<2x256xf32>
    %382 = arith.mulf %381, %380 : vector<2x256xf32>
    %383 = arith.addf %378, %382 : vector<2x256xf32>
    %384 = vector.extract_strided_slice %84 {offsets = [0, 27], sizes = [2, 1], strides = [1, 1]} : vector<2x49xf32> to vector<2x1xf32>
    %385 = vector.extract_strided_slice %120 {offsets = [0, 54], sizes = [2, 256], strides = [1, 1]} : vector<2x358xf32> to vector<2x256xf32>
    %386 = vector.broadcast %384 : vector<2x1xf32> to vector<2x256xf32>
    %387 = arith.mulf %386, %385 : vector<2x256xf32>
    %388 = arith.addf %383, %387 : vector<2x256xf32>
    %389 = vector.extract_strided_slice %84 {offsets = [0, 34], sizes = [2, 1], strides = [1, 1]} : vector<2x49xf32> to vector<2x1xf32>
    %390 = vector.extract_strided_slice %120 {offsets = [0, 70], sizes = [2, 256], strides = [1, 1]} : vector<2x358xf32> to vector<2x256xf32>
    %391 = vector.broadcast %389 : vector<2x1xf32> to vector<2x256xf32>
    %392 = arith.mulf %391, %390 : vector<2x256xf32>
    %393 = arith.addf %388, %392 : vector<2x256xf32>
    %394 = vector.extract_strided_slice %84 {offsets = [0, 41], sizes = [2, 1], strides = [1, 1]} : vector<2x49xf32> to vector<2x1xf32>
    %395 = vector.extract_strided_slice %120 {offsets = [0, 86], sizes = [2, 256], strides = [1, 1]} : vector<2x358xf32> to vector<2x256xf32>
    %396 = vector.broadcast %394 : vector<2x1xf32> to vector<2x256xf32>
    %397 = arith.mulf %396, %395 : vector<2x256xf32>
    %398 = arith.addf %393, %397 : vector<2x256xf32>
    %399 = vector.extract_strided_slice %84 {offsets = [0, 48], sizes = [2, 1], strides = [1, 1]} : vector<2x49xf32> to vector<2x1xf32>
    %400 = vector.extract_strided_slice %120 {offsets = [0, 102], sizes = [2, 256], strides = [1, 1]} : vector<2x358xf32> to vector<2x256xf32>
    %401 = vector.broadcast %399 : vector<2x1xf32> to vector<2x256xf32>
    %402 = arith.mulf %401, %400 : vector<2x256xf32>
    %403 = arith.addf %398, %402 : vector<2x256xf32>
    %cst_55 = arith.constant 0.000000e+00 : f32
    %404 = vector.shape_cast %81 : vector<1x256xi1> to vector<1x256xi1>
    %405 = vector.broadcast %404 : vector<1x256xi1> to vector<2x256xi1>
    %406 = vector.broadcast %cst_55 : f32 to vector<2x256xf32>
    %407 = arith.select %405, %403, %406 : vector<2x256xi1>, vector<2x256xf32>
    %408 = arith.addf %367, %407 : vector<2x256xf32>
    %cst_56 = arith.constant dense<0.000000e+00> : vector<256xf32>
    %409 = vector.multi_reduction <add>, %408, %cst_56 [0] : vector<2x256xf32> to vector<256xf32>
    %410 = vector.shape_cast %409 : vector<256xf32> to vector<1x256xf32>
    %411 = arith.negf %410 : vector<1x256xf32>
    %412 = math.exp %411 : vector<1x256xf32>
    %cst_57 = arith.constant 1.000000e+00 : f32
    %413 = vector.broadcast %cst_57 : f32 to vector<1x256xf32>
    %414 = arith.addf %413, %412 : vector<1x256xf32>
    %415 = arith.divf %413, %414 : vector<1x256xf32>
    %416 = vector.broadcast %415 : vector<1x256xf32> to vector<8x256xf32>
    %417 = arith.mulf %113, %416 : vector<8x256xf32>
    %c0_58 = arith.constant 0 : index
    %c0_59 = arith.constant 0 : index
    %c0_60 = arith.constant 0 : index
    %418 = vector.load %arg4[%c0_58, %c0_59, %c0_60] : memref<1x8x256xf32, #tpu.memory_space<vmem>>, vector<1x8x256xf32>
    %419 = vector.shape_cast %418 : vector<1x8x256xf32> to vector<8x256xf32>
    %420 = vector.shape_cast %417 : vector<8x256xf32> to vector<1x8x256xf32>
    tpu.vector_store %arg4[%c0_58, %c0_59, %c0_60], %420 {strides = array<i32>} : memref<1x8x256xf32, #tpu.memory_space<vmem>>, vector<1x8x256xf32>,
    return
  }
  func.func @transform_0(%arg0: i32) -> i32 {
    %c0_i32 = arith.constant 0 : i32
    %c0_i32_0 = arith.constant 0 : i32
    return %c0_i32 : i32
  }
  func.func @transform_1(%arg0: i32) -> (i32, i32) {
    %c0_i32 = arith.constant 0 : i32
    %c0_i32_0 = arith.constant 0 : i32
    %c0_i32_1 = arith.constant 0 : i32
    return %c0_i32, %c0_i32_0 : i32, i32
  }
  func.func @transform_2(%arg0: i32) -> (i32, i32, i32) {
    %c0_i32 = arith.constant 0 : i32
    %c0_i32_0 = arith.constant 0 : i32
    %c0_i32_1 = arith.constant 0 : i32
    return %arg0, %c0_i32, %c0_i32_0 : i32, i32, i32
  }
  func.func @transform_3(%arg0: i32) -> (i32, i32, i32) {
    %c0_i32 = arith.constant 0 : i32
    %c0_i32_0 = arith.constant 0 : i32
    %c0_i32_1 = arith.constant 0 : i32
    return %arg0, %c0_i32, %c0_i32_0 : i32, i32, i32
  }
}

</mosaic_0001>

<llo_original>
// kernel: ecbam_forward.1
$region0: #{ecbam_forward.1}
  #allocation0 [shape = 'u32[]', space=smem, size = 0x4, offset = 0x4, fixed_abs, tag = 'smem constant byte address 0x4 - core index']
  #allocation1 [shape = 'u32[72,128]{1,0:T(1,128)}', space=vmem, size = 0x9000, scoped, tag = 'internal scratch']
  %s0 = inlined_call_operand.vmem [shape: f32[3], index: 0, kind: input, shape index: {}]
  %s1 = inlined_call_operand.vmem [shape: f32[2,49], index: 1, kind: input, shape index: {}]
  %s2 = inlined_call_operand.vmem [shape: f32[2,8,256], index: 2, kind: input, shape index: {}]
  %s3 = inlined_call_operand.vmem [shape: f32[2,8,256], index: 3, kind: output, shape index: {}]
  %s4 = sld [smem:[#allocation0]]
  $region49: #{ecbam_forward.1} parent=0
    _
  %s6 = ssub.s32 1, %s4
  %s7 = scalar_select 0, %s6, %s4
  $region1: #{ecbam_forward.1} parent=0
    #allocation2 [shape = 'u8[512]{0}', space=smem, size = 0x200, scoped, tag = 'input window, operand 0, single buffered']
    #allocation3 [shape = 's32[2]{0}', space=sflag, size = 0x8, scoped, tag = 'scoped memory for ecbam_forward.1']
    %8 = vsyncpa [#allocation3], 0
    loop: start=0, step=1, limit=4
    $region2: #{ecbam_forward.1} parent=1 // loop_pre_header
      _
    $region3: #{ecbam_forward.1} parent=1 // loop_header
      %s10 = sphi 0, %s14
      %p11 = scmp.ge.s32.totalorder %s10, 4
      %s18 = sphi 0, %s18
      %s20 = sphi 0, %s18
      %s21 = sphi 0, %s20
      %s35 = sphi 0, %s21
      %s39 = sphi 0, %s39
      %s41 = sphi 0, %s39
      %s42 = sphi 0, %s41
      %s56 = sphi 0, %s42
      %s62 = sphi 0, %s64
      %s65 = sphi 0, %s62
      %s66 = sphi 0, %s65
      %s82 = sphi 0, %s66
      %s88 = sphi 0, %s90
      %s91 = sphi 0, %s88
      %s92 = sphi 0, %s91
      %s108 = sphi 0, %s92
    $region4: #{ecbam_forward.1} parent=1 // loop_header_branch
      %13 = sbr.rel (%p11) target = $region8
    $region5: #{ecbam_forward.1} parent=1 // loop_body
      %s15 = ssub.s32 %s10, 1
      %s16 = ssub.s32 %s10, 2
      %s17 = sadd.s32 %s10, 1
      %s19 = sadd.s32 %s18, 1
      %p22 = scmp.eq.s32.totalorder %s10, 1
      %p23 = scmp.ne.s32.totalorder %s18, %s20
      %p24 = scmp.eq.s32.totalorder %s10, 0
      %p25 = por %p23, %p24
      %p26 = scmp.ne.s32.totalorder %s18, %s20
      %p27 = scmp.eq.s32.totalorder %s15, 1
      %p28 = por %p26, %p27
      %p29 = scmp.ne.s32.totalorder %s20, %s21
      %p30 = scmp.eq.s32.totalorder %s15, 0
      %p31 = por %p29, %p30
      %p32 = scmp.ne.s32.totalorder %s20, %s21
      %p33 = scmp.eq.s32.totalorder %s16, 1
      %p34 = por %p32, %p33
      %p36 = scmp.ne.s32.totalorder %s21, %s35
      %p37 = scmp.eq.s32.totalorder %s16, 0
      %p38 = por %p36, %p37
      %s40 = sadd.s32 %s39, 1
      %p43 = scmp.eq.s32.totalorder %s10, 1
      %p44 = scmp.ne.s32.totalorder %s39, %s41
      %p45 = scmp.eq.s32.totalorder %s10, 0
      %p46 = por %p44, %p45
      %p47 = scmp.ne.s32.totalorder %s39, %s41
      %p48 = scmp.eq.s32.totalorder %s15, 1
      %p49 = por %p47, %p48
      %p50 = scmp.ne.s32.totalorder %s41, %s42
      %p51 = scmp.eq.s32.totalorder %s15, 0
      %p52 = por %p50, %p51
      %p53 = scmp.ne.s32.totalorder %s41, %s42
      %p54 = scmp.eq.s32.totalorder %s16, 1
      %p55 = por %p53, %p54
      %p57 = scmp.ne.s32.totalorder %s42, %s56
      %p58 = scmp.eq.s32.totalorder %s16, 0
      %p59 = por %p57, %p58
      %s60 = ssub.s32 %s10, %s17
      %p61 = scmp.eq.s32.totalorder %s60, 0
      %s63 = sadd.s32 %s62, 1
      %s64 = scalar_select %p61, %s62, %s63
      %p67 = pneg %p61
      %p68 = scmp.eq.s32.totalorder %s10, 1
      %p69 = por %p67, %p68
      %p70 = scmp.ne.s32.totalorder %s62, %s65
      %p71 = scmp.eq.s32.totalorder %s10, 0
      %p72 = por %p70, %p71
      %p73 = scmp.ne.s32.totalorder %s62, %s65
      %p74 = scmp.eq.s32.totalorder %s15, 1
      %p75 = por %p73, %p74
      %p76 = scmp.ne.s32.totalorder %s65, %s66
      %p77 = scmp.eq.s32.totalorder %s15, 0
      %p78 = por %p76, %p77
      %p79 = scmp.ne.s32.totalorder %s65, %s66
      %p80 = scmp.eq.s32.totalorder %s16, 1
      %p81 = por %p79, %p80
      %p83 = scmp.ne.s32.totalorder %s66, %s82
      %p84 = scmp.eq.s32.totalorder %s16, 0
      %p85 = por %p83, %p84
      %s86 = ssub.s32 %s10, %s17
      %p87 = scmp.eq.s32.totalorder %s86, 0
      %s89 = sadd.s32 %s88, 1
      %s90 = scalar_select %p87, %s88, %s89
      %p93 = pneg %p87
      %p94 = scmp.eq.s32.totalorder %s10, 1
      %p95 = por %p93, %p94
      %p96 = scmp.ne.s32.totalorder %s88, %s91
      %p97 = scmp.eq.s32.totalorder %s10, 0
      %p98 = por %p96, %p97
      %p99 = scmp.ne.s32.totalorder %s88, %s91
      %p100 = scmp.eq.s32.totalorder %s15, 1
      %p101 = por %p99, %p100
      %p102 = scmp.ne.s32.totalorder %s91, %s92
      %p103 = scmp.eq.s32.totalorder %s15, 0
      %p104 = por %p102, %p103
      %p105 = scmp.ne.s32.totalorder %s91, %s92
      %p106 = scmp.eq.s32.totalorder %s16, 1
      %p107 = por %p105, %p106
      %p109 = scmp.ne.s32.totalorder %s92, %s108
      %p110 = scmp.eq.s32.totalorder %s16, 0
      %p111 = por %p109, %p110
      %p112 = scmp.le.s32.totalorder 1, %s10
      %p113 = scmp.lt.s32.totalorder %s10, 3
      %p114 = pnand %p112, %p113
      %p115 = pneg %p114
      // Predicated region
      $region9: #{ecbam_forward.1} parent=5 // pred_check
        _
      $region10: #{ecbam_forward.1} parent=5 // pred_check_branch
        %117 = sbr.rel (%p114) target = $region12
      $region11: #{ecbam_forward.1} parent=5 // pred_region
        %s118 = ssub.s32 %s10, 1
        // Predicated region
        $region13: #{ecbam_forward.1} parent=11 // pred_check
          %p119 = pneg %p31
        $region14: #{ecbam_forward.1} parent=11 // pred_check_branch
          %121 = sbr.rel (%p119) target = $region16
        $region15: #{ecbam_forward.1} parent=11 // pred_region
          %123 = vsyncadd [#allocation3], 0
          %s125 = sshll.u32 %s0, 4
          %s126 = int_to_ptr.vmem [resolvable:$true] %s125
          %128 = dma.vmem_to_smem %s126, 16, [#allocation2], [#allocation3]
        $region16: #{ecbam_forward.1} parent=11 // pred_fallthru
          _
        // Predicated region
        $region17: #{ecbam_forward.1} parent=11 // pred_check
          %p129 = pneg %p52
        $region18: #{ecbam_forward.1} parent=11 // pred_check_branch
          %131 = sbr.rel (%p129) target = $region20
        $region19: #{ecbam_forward.1} parent=11 // pred_region
          _
        $region20: #{ecbam_forward.1} parent=11 // pred_fallthru
          _
      $region12: #{ecbam_forward.1} parent=5 // pred_fallthru
        _
      %p132 = scmp.lt.s32.totalorder %s10, 2
      // Predicated region
      $region21: #{ecbam_forward.1} parent=5 // pred_check
        %p133 = pneg %p132
      $region22: #{ecbam_forward.1} parent=5 // pred_check_branch
        %135 = sbr.rel (%p133) target = $region24
      $region23: #{ecbam_forward.1} parent=5 // pred_region
        // Predicated region
        $region25: #{ecbam_forward.1} parent=23 // pred_check
          %p136 = pneg %p72
        $region26: #{ecbam_forward.1} parent=23 // pred_check_branch
          %138 = sbr.rel (%p136) target = $region28
        $region27: #{ecbam_forward.1} parent=23 // pred_region
          %p139 = scmp.lt.s32.totalorder %s10, 1
          %s140 = scalar_select %p139, %s10, 1
          %s141 = smul.addr %s140, 2
          %s142 = smul.addr %s141, 8
          %s143 = scalar_lea.vmem %s2, %s142
        $region28: #{ecbam_forward.1} parent=23 // pred_fallthru
          _
      $region24: #{ecbam_forward.1} parent=5 // pred_fallthru
        _
      %p144 = scmp.le.s32.totalorder 1, %s10
      %p145 = scmp.lt.s32.totalorder %s10, 3
      %p146 = pnand %p144, %p145
      %p147 = pneg %p146
      // Predicated region
      $region29: #{ecbam_forward.1} parent=5 // pred_check
        _
      $region30: #{ecbam_forward.1} parent=5 // pred_check_branch
        %149 = sbr.rel (%p146) target = $region32
      $region31: #{ecbam_forward.1} parent=5 // pred_region
        %s150 = ssub.s32 %s10, 1
        // Predicated region
        $region33: #{ecbam_forward.1} parent=31 // pred_check
          %p151 = pneg %p31
        $region34: #{ecbam_forward.1} parent=31 // pred_check_branch
          %153 = sbr.rel (%p151) target = $region36
        $region35: #{ecbam_forward.1} parent=31 // pred_region
          %155 = dma.done [#allocation3], 16
        $region36: #{ecbam_forward.1} parent=31 // pred_fallthru
          _
        %156 = sfence
        %p157 = pneg %p31
        %p158 = pneg %p28
        %p159 = pneg %p52
        %p160 = pneg %p49
        %p161 = scmp.lt.s32.totalorder %s15, 1
        %s162 = scalar_select %p161, %s15, 1
        %s163 = smul.addr %s162, 2
        %s164 = smul.addr %s163, 8
        %s165 = scalar_lea.vmem %s2, %s164
        %p166 = pneg %p78
        %p167 = pneg %p75
        %p168 = pneg %p104
        %p169 = pneg %p101
        %p170 = scmp.lt.s32.totalorder %s15, 1
        %s171 = scalar_select %p170, %s15, 1
        %s172 = smul.addr %s171, 2
        %s173 = smul.addr %s172, 8
        %s174 = scalar_lea.vmem %s3, %s173
        %p175 = scmp.lt.s32.totalorder %s15, 1
        %s176 = scalar_select %p175, %s15, 1
        %s177 = smul.addr %s176, 2
        %s178 = smul.addr %s177, 8
        %s179 = scalar_lea.vmem %s2, %s178
        %p180 = scmp.lt.s32.totalorder %s15, 1
        %s181 = scalar_select %p180, %s15, 1
        %s182 = smul.addr %s181, 2
        %s183 = smul.addr %s182, 8
        %s184 = scalar_lea.vmem %s3, %s183
        %v185 = vlaneseq
        %v186 = vand.u32 %v185, 127
        %v187 = vadd.s32 %v186, 128
        %vm188 = vcmp.lt.s32.totalorder %v186, 0
        %v189 = vsub.s32 0, %v186
        %v190 = vsel %vm188, %v189, %v186
        %v191 = vshrl.u32 %v190, 4
        %v192 = vand.u32 %v190, 15
        %v193 = vsub.s32 0, %v192
        %v194 = vsel %vm188, %v193, %v192
        %vm195 = vcmp.lt.s32.totalorder %v187, 0
        %v196 = vsub.s32 0, %v187
        %v197 = vsel %vm195, %v196, %v187
        %v198 = vshrl.u32 %v197, 4
        %v199 = vand.u32 %v197, 15
        %v200 = vsub.s32 0, %v199
        %v201 = vsel %vm195, %v200, %v199
        %vm202 = vcmp.ne.s32.totalorder %v194, 0
        %vm203 = vcmp.ne.s32.totalorder %v201, 0
        %vm204 = vcmp.lt.s32.totalorder %v194, 0
        %vm205 = vcmp.lt.s32.totalorder %v201, 0
        %vm206 = vmand %vm204, %vm202
        %vm207 = vmand %vm205, %vm203
        %v208 = vadd.s32 %v194, 16
        %v209 = vadd.s32 %v201, 16
        %v210 = vsel %vm206, %v208, %v194
        %v211 = vsel %vm207, %v209, %v201
        %v212 = vadd.s32 %v210, 4294967293
        %v213 = vadd.s32 %v211, 4294967293
        %vm214 = vcmp.ge.s32.totalorder %v212, 0
        %vm215 = vcmp.ge.s32.totalorder %v213, 0
        %vm216 = vcmp.lt.s32.totalorder %v212, 16
        %vm217 = vcmp.lt.s32.totalorder %v213, 16
        %vm218 = vmand %vm214, %vm216
        %vm219 = vmand %vm215, %vm217
        %v220 = vadd.s32 %v210, 4294967294
        %v221 = vadd.s32 %v211, 4294967294
        %vm222 = vcmp.ge.s32.totalorder %v220, 0
        %vm223 = vcmp.ge.s32.totalorder %v221, 0
        %vm224 = vcmp.lt.s32.totalorder %v220, 16
        %vm225 = vcmp.lt.s32.totalorder %v221, 16
        %vm226 = vmand %vm222, %vm224
        %vm227 = vmand %vm223, %vm225
        %v228 = vadd.s32 %v210, 4294967295
        %v229 = vadd.s32 %v211, 4294967295
        %vm230 = vcmp.ge.s32.totalorder %v228, 0
        %vm231 = vcmp.ge.s32.totalorder %v229, 0
        %vm232 = vcmp.lt.s32.totalorder %v228, 16
        %vm233 = vcmp.lt.s32.totalorder %v229, 16
        %vm234 = vmand %vm230, %vm232
        %vm235 = vmand %vm231, %vm233
        %vm236 = vcmp.ge.s32.totalorder %v210, 0
        %vm237 = vcmp.ge.s32.totalorder %v211, 0
        %vm238 = vcmp.lt.s32.totalorder %v210, 16
        %vm239 = vcmp.lt.s32.totalorder %v211, 16
        %vm240 = vmand %vm236, %vm238
        %vm241 = vmand %vm237, %vm239
        %v242 = vadd.s32 %v210, 1
        %v243 = vadd.s32 %v211, 1
        %vm244 = vcmp.ge.s32.totalorder %v242, 0
        %vm245 = vcmp.ge.s32.totalorder %v243, 0
        %vm246 = vcmp.lt.s32.totalorder %v242, 16
        %vm247 = vcmp.lt.s32.totalorder %v243, 16
        %vm248 = vmand %vm244, %vm246
        %vm249 = vmand %vm245, %vm247
        %v250 = vadd.s32 %v210, 2
        %v251 = vadd.s32 %v211, 2
        %vm252 = vcmp.ge.s32.totalorder %v250, 0
        %vm253 = vcmp.ge.s32.totalorder %v251, 0
        %vm254 = vcmp.lt.s32.totalorder %v250, 16
        %vm255 = vcmp.lt.s32.totalorder %v251, 16
        %vm256 = vmand %vm252, %vm254
        %vm257 = vmand %vm253, %vm255
        %v258 = vadd.s32 %v210, 3
        %v259 = vadd.s32 %v211, 3
        %vm260 = vcmp.ge.s32.totalorder %v258, 0
        %vm261 = vcmp.ge.s32.totalorder %v259, 0
        %vm262 = vcmp.lt.s32.totalorder %v258, 16
        %vm263 = vcmp.lt.s32.totalorder %v259, 16
        %vm264 = vmand %vm260, %vm262
        %vm265 = vmand %vm261, %vm263
        %v266 = vld [vmem:[%s1] sm:$0x3]
        %v267 = vld [vmem:[%s179] sm:$0xff]
        %v268 = vld [vmem:[%s179 + $0x8] sm:$0xff]
        %269 = vmatpush.msra.mxu0 1.0
        %270 = vmatpush.msra.mxu0 1.0
        %271 = vmatpush.msra.mxu0 1.0
        %272 = vmatpush.msra.mxu0 1.0
        %273 = vmatpush.msra.mxu0 1.0
        %274 = vmatpush.msra.mxu0 1.0
        %275 = vmatpush.msra.mxu0 1.0
        %276 = vmatpush.msra.mxu0 1.0
        %277 = vmatpush.msra.mxu0 1.0
        %278 = vmatpush.msra.mxu0 1.0
        %279 = vmatpush.msra.mxu0 1.0
        %280 = vmatpush.msra.mxu0 1.0
        %281 = vmatpush.msra.mxu0 1.0
        %282 = vmatpush.msra.mxu0 1.0
        %283 = vmatpush.msra.mxu0 1.0
        %284 = vmatpush.msra.mxu0 1.0
        %v285 = vand.u32 %v267, 4294901760
        %v286 = vsub.f32 %v267, %v285
        %v287 = vand.u32 %v286, 4294901760
        %v288 = vsub.f32 %v286, %v287
        %v289 = vand.u32 %v288, 4294901760
        %290 = vmatmul.f32.gmra.mxu0 %v289
        %v291 = vpop.f32.mrf.mxu0
        %v292 = vadd.f32 0.0, %v291
        %293 = vdwg.mxu0
        %294 = vmatpush.msra.mxu0 0.0
        %295 = vmatpush.msra.mxu0 0.0
        %296 = vmatpush.msra.mxu0 0.0
        %297 = vmatpush.msra.mxu0 0.0
        %298 = vmatpush.msra.mxu0 0.0
        %299 = vmatpush.msra.mxu0 0.0
        %300 = vmatpush.msra.mxu0 0.0
        %301 = vmatpush.msra.mxu0 0.0
        %302 = vmatpush.msra.mxu0 0.0
        %303 = vmatpush.msra.mxu0 0.0
        %304 = vmatpush.msra.mxu0 0.0
        %305 = vmatpush.msra.mxu0 0.0
        %306 = vmatpush.msra.mxu0 0.0
        %307 = vmatpush.msra.mxu0 0.0
        %308 = vmatpush.msra.mxu0 0.0
        %309 = vmatpush.msra.mxu0 0.0
        %v310 = vand.u32 %v267, 4294901760
        %311 = vmatmul.f32.gmra.mxu0 %v310
        %v312 = vpop.f32.mrf.mxu0
        %v313 = vadd.f32 %v292, %v312
        %314 = vdwg.mxu0
        %315 = vmatpush.msra.mxu0 0.0
        %316 = vmatpush.msra.mxu0 0.0
        %317 = vmatpush.msra.mxu0 0.0
        %318 = vmatpush.msra.mxu0 0.0
        %319 = vmatpush.msra.mxu0 0.0
        %320 = vmatpush.msra.mxu0 0.0
        %321 = vmatpush.msra.mxu0 0.0
        %322 = vmatpush.msra.mxu0 0.0
        %323 = vmatpush.msra.mxu0 0.0
        %324 = vmatpush.msra.mxu0 0.0
        %325 = vmatpush.msra.mxu0 0.0
        %326 = vmatpush.msra.mxu0 0.0
        %327 = vmatpush.msra.mxu0 0.0
        %328 = vmatpush.msra.mxu0 0.0
        %329 = vmatpush.msra.mxu0 0.0
        %330 = vmatpush.msra.mxu0 0.0
        %v331 = vand.u32 %v267, 4294901760
        %v332 = vsub.f32 %v267, %v331
        %333 = vmatmul.f32.gmra.mxu0 %v332
        %v334 = vpop.f32.mrf.mxu0
        %v335 = vadd.f32 %v313, %v334
        %336 = vdwg.mxu0
        %337 = vmatpush.msra.mxu0 1.0
        %338 = vmatpush.msra.mxu0 1.0
        %339 = vmatpush.msra.mxu0 1.0
        %340 = vmatpush.msra.mxu0 1.0
        %341 = vmatpush.msra.mxu0 1.0
        %342 = vmatpush.msra.mxu0 1.0
        %343 = vmatpush.msra.mxu0 1.0
        %344 = vmatpush.msra.mxu0 1.0
        %345 = vmatpush.msra.mxu0 1.0
        %346 = vmatpush.msra.mxu0 1.0
        %347 = vmatpush.msra.mxu0 1.0
        %348 = vmatpush.msra.mxu0 1.0
        %349 = vmatpush.msra.mxu0 1.0
        %350 = vmatpush.msra.mxu0 1.0
        %351 = vmatpush.msra.mxu0 1.0
        %352 = vmatpush.msra.mxu0 1.0
        %v353 = vand.u32 %v267, 4294901760
        %v354 = vsub.f32 %v267, %v353
        %v355 = vand.u32 %v354, 4294901760
        %356 = vmatmul.f32.gmra.mxu0 %v355
        %v357 = vpop.f32.mrf.mxu0
        %v358 = vadd.f32 %v335, %v357
        %359 = vdwg.mxu0
        %360 = vmatpush.msra.mxu0 0.0
        %361 = vmatpush.msra.mxu0 0.0
        %362 = vmatpush.msra.mxu0 0.0
        %363 = vmatpush.msra.mxu0 0.0
        %364 = vmatpush.msra.mxu0 0.0
        %365 = vmatpush.msra.mxu0 0.0
        %366 = vmatpush.msra.mxu0 0.0
        %367 = vmatpush.msra.mxu0 0.0
        %368 = vmatpush.msra.mxu0 0.0
        %369 = vmatpush.msra.mxu0 0.0
        %370 = vmatpush.msra.mxu0 0.0
        %371 = vmatpush.msra.mxu0 0.0
        %372 = vmatpush.msra.mxu0 0.0
        %373 = vmatpush.msra.mxu0 0.0
        %374 = vmatpush.msra.mxu0 0.0
        %375 = vmatpush.msra.mxu0 0.0
        %v376 = vand.u32 %v267, 4294901760
        %377 = vmatmul.f32.gmra.mxu0 %v376
        %v378 = vpop.f32.mrf.mxu0
        %v379 = vadd.f32 %v358, %v378
        %380 = vdwg.mxu0
        %381 = vmatpush.msra.mxu0 1.0
        %382 = vmatpush.msra.mxu0 1.0
        %383 = vmatpush.msra.mxu0 1.0
        %384 = vmatpush.msra.mxu0 1.0
        %385 = vmatpush.msra.mxu0 1.0
        %386 = vmatpush.msra.mxu0 1.0
        %387 = vmatpush.msra.mxu0 1.0
        %388 = vmatpush.msra.mxu0 1.0
        %389 = vmatpush.msra.mxu0 1.0
        %390 = vmatpush.msra.mxu0 1.0
        %391 = vmatpush.msra.mxu0 1.0
        %392 = vmatpush.msra.mxu0 1.0
        %393 = vmatpush.msra.mxu0 1.0
        %394 = vmatpush.msra.mxu0 1.0
        %395 = vmatpush.msra.mxu0 1.0
        %396 = vmatpush.msra.mxu0 1.0
        %v397 = vand.u32 %v267, 4294901760
        %398 = vmatmul.f32.gmra.mxu0 %v397
        %v399 = vpop.f32.mrf.mxu0
        %v400 = vadd.f32 %v379, %v399
        %401 = vdwg.mxu0
        %402 = vmatpush.msra.mxu0 1.0
        %403 = vmatpush.msra.mxu0 1.0
        %404 = vmatpush.msra.mxu0 1.0
        %405 = vmatpush.msra.mxu0 1.0
        %406 = vmatpush.msra.mxu0 1.0
        %407 = vmatpush.msra.mxu0 1.0
        %408 = vmatpush.msra.mxu0 1.0
        %409 = vmatpush.msra.mxu0 1.0
        %410 = vmatpush.msra.mxu0 1.0
        %411 = vmatpush.msra.mxu0 1.0
        %412 = vmatpush.msra.mxu0 1.0
        %413 = vmatpush.msra.mxu0 1.0
        %414 = vmatpush.msra.mxu0 1.0
        %415 = vmatpush.msra.mxu0 1.0
        %416 = vmatpush.msra.mxu0 1.0
        %417 = vmatpush.msra.mxu0 1.0
        %v418 = vand.u32 %v268, 4294901760
        %v419 = vsub.f32 %v268, %v418
        %v420 = vand.u32 %v419, 4294901760
        %v421 = vsub.f32 %v419, %v420
        %v422 = vand.u32 %v421, 4294901760
        %423 = vmatmul.f32.gmra.mxu0 %v422
        %v424 = vpop.f32.mrf.mxu0
        %v425 = vadd.f32 %v400, %v424
        %426 = vdwg.mxu0
        %427 = vmatpush.msra.mxu0 0.0
        %428 = vmatpush.msra.mxu0 0.0
        %429 = vmatpush.msra.mxu0 0.0
        %430 = vmatpush.msra.mxu0 0.0
        %431 = vmatpush.msra.mxu0 0.0
        %432 = vmatpush.msra.mxu0 0.0
        %433 = vmatpush.msra.mxu0 0.0
        %434 = vmatpush.msra.mxu0 0.0
        %435 = vmatpush.msra.mxu0 0.0
        %436 = vmatpush.msra.mxu0 0.0
        %437 = vmatpush.msra.mxu0 0.0
        %438 = vmatpush.msra.mxu0 0.0
        %439 = vmatpush.msra.mxu0 0.0
        %440 = vmatpush.msra.mxu0 0.0
        %441 = vmatpush.msra.mxu0 0.0
        %442 = vmatpush.msra.mxu0 0.0
        %v443 = vand.u32 %v268, 4294901760
        %444 = vmatmul.f32.gmra.mxu0 %v443
        %v445 = vpop.f32.mrf.mxu0
        %v446 = vadd.f32 %v425, %v445
        %447 = vdwg.mxu0
        %448 = vmatpush.msra.mxu0 0.0
        %449 = vmatpush.msra.mxu0 0.0
        %450 = vmatpush.msra.mxu0 0.0
        %451 = vmatpush.msra.mxu0 0.0
        %452 = vmatpush.msra.mxu0 0.0
        %453 = vmatpush.msra.mxu0 0.0
        %454 = vmatpush.msra.mxu0 0.0
        %455 = vmatpush.msra.mxu0 0.0
        %456 = vmatpush.msra.mxu0 0.0
        %457 = vmatpush.msra.mxu0 0.0
        %458 = vmatpush.msra.mxu0 0.0
        %459 = vmatpush.msra.mxu0 0.0
        %460 = vmatpush.msra.mxu0 0.0
        %461 = vmatpush.msra.mxu0 0.0
        %462 = vmatpush.msra.mxu0 0.0
        %463 = vmatpush.msra.mxu0 0.0
        %v464 = vand.u32 %v268, 4294901760
        %v465 = vsub.f32 %v268, %v464
        %466 = vmatmul.f32.gmra.mxu0 %v465
        %v467 = vpop.f32.mrf.mxu0
        %v468 = vadd.f32 %v446, %v467
        %469 = vdwg.mxu0
        %470 = vmatpush.msra.mxu0 1.0
        %471 = vmatpush.msra.mxu0 1.0
        %472 = vmatpush.msra.mxu0 1.0
        %473 = vmatpush.msra.mxu0 1.0
        %474 = vmatpush.msra.mxu0 1.0
        %475 = vmatpush.msra.mxu0 1.0
        %476 = vmatpush.msra.mxu0 1.0
        %477 = vmatpush.msra.mxu0 1.0
        %478 = vmatpush.msra.mxu0 1.0
        %479 = vmatpush.msra.mxu0 1.0
        %480 = vmatpush.msra.mxu0 1.0
        %481 = vmatpush.msra.mxu0 1.0
        %482 = vmatpush.msra.mxu0 1.0
        %483 = vmatpush.msra.mxu0 1.0
        %484 = vmatpush.msra.mxu0 1.0
        %485 = vmatpush.msra.mxu0 1.0
        %v486 = vand.u32 %v268, 4294901760
        %v487 = vsub.f32 %v268, %v486
        %v488 = vand.u32 %v487, 4294901760
        %489 = vmatmul.f32.gmra.mxu0 %v488
        %v490 = vpop.f32.mrf.mxu0
        %v491 = vadd.f32 %v468, %v490
        %492 = vdwg.mxu0
        %493 = vmatpush.msra.mxu0 0.0
        %494 = vmatpush.msra.mxu0 0.0
        %495 = vmatpush.msra.mxu0 0.0
        %496 = vmatpush.msra.mxu0 0.0
        %497 = vmatpush.msra.mxu0 0.0
        %498 = vmatpush.msra.mxu0 0.0
        %499 = vmatpush.msra.mxu0 0.0
        %500 = vmatpush.msra.mxu0 0.0
        %501 = vmatpush.msra.mxu0 0.0
        %502 = vmatpush.msra.mxu0 0.0
        %503 = vmatpush.msra.mxu0 0.0
        %504 = vmatpush.msra.mxu0 0.0
        %505 = vmatpush.msra.mxu0 0.0
        %506 = vmatpush.msra.mxu0 0.0
        %507 = vmatpush.msra.mxu0 0.0
        %508 = vmatpush.msra.mxu0 0.0
        %v509 = vand.u32 %v268, 4294901760
        %510 = vmatmul.f32.gmra.mxu0 %v509
        %v511 = vpop.f32.mrf.mxu0
        %v512 = vadd.f32 %v491, %v511
        %513 = vdwg.mxu0
        %514 = vmatpush.msra.mxu0 1.0
        %515 = vmatpush.msra.mxu0 1.0
        %516 = vmatpush.msra.mxu0 1.0
        %517 = vmatpush.msra.mxu0 1.0
        %518 = vmatpush.msra.mxu0 1.0
        %519 = vmatpush.msra.mxu0 1.0
        %520 = vmatpush.msra.mxu0 1.0
        %521 = vmatpush.msra.mxu0 1.0
        %522 = vmatpush.msra.mxu0 1.0
        %523 = vmatpush.msra.mxu0 1.0
        %524 = vmatpush.msra.mxu0 1.0
        %525 = vmatpush.msra.mxu0 1.0
        %526 = vmatpush.msra.mxu0 1.0
        %527 = vmatpush.msra.mxu0 1.0
        %528 = vmatpush.msra.mxu0 1.0
        %529 = vmatpush.msra.mxu0 1.0
        %v530 = vand.u32 %v268, 4294901760
        %531 = vmatmul.f32.gmra.mxu0 %v530
        %v532 = vpop.f32.mrf.mxu0
        %v533 = vadd.f32 %v512, %v532
        %534 = vdwg.mxu0
        %v535 = vmul.f32 %v533, 0.00390625
        %v537 = vrot.slane %v535, 7
        %vm539 = vcmask 1040384
        %v540 = vsel %vm539, 0.0, %v537
        %v541 = vsel %vm539, %v537, 0.0
        %s542 = sld [smem:[#allocation2]]
        %v543 = vstv %s542
        %v544 = vmul.f32 %v543, %v540
        %v545 = vadd.f32 %v544, 0.0
        %s546 = sld [smem:[#allocation2 + $0x1]]
        %v547 = vstv %s546
        %v548 = vmul.f32 %v547, %v540
        %v549 = vmul.f32 %v547, %v541
        %vm552 = vcmask 1046528
        %v553 = vrot.slane %v548, 1
        %v554 = vrot.slane %v549, 1
        %v555 = vsel %vm552, %v553, %v554
        %v557 = vadd.f32 %v545, %v555
        %s558 = sld [smem:[#allocation2 + $0x2]]
        %v559 = vstv %s558
        %v560 = vmul.f32 %v559, %v540
        %v561 = vmul.f32 %v559, %v541
        %vm564 = vcmask 1045504
        %v565 = vrot.slane %v560, 2
        %v566 = vrot.slane %v561, 2
        %v567 = vsel %vm564, %v565, %v566
        %v569 = vadd.f32 %v557, %v567
        %v570 = vxor.u32 %v569, 2147483648
        %v571 = vmul.f32 %v570, 1.442695
        %v572 = vpow.pop %v571
        %v573 = vadd.f32 %v572, 1.0
        %v574 = vrcp.pop %v573
        %v575 = vmul.f32 %v573, %v574
        %v576 = vsub.f32 1.0, %v575
        %v577 = vmul.f32 %v574, %v576
        %v578 = vadd.f32 %v574, %v577
        %vm579 = vweird.f32 %v573
        %vm580 = vweird.f32 %v574
        %vm581 = vmor %vm579, %vm580
        %v582 = vsel %vm581, %v574, %v578
        %v583 = vand.u32 2147483647, %v573
        %vm584 = vcmp.eq.f32.partialorder %v583, 8.507059e+37
        %v585 = vand.u32 %v573, 2147483648
        %v586 = vor.u32 1.1754944e-38, %v585
        %v587 = vsel %vm584, %v586, %v582
        %v588 = vmul.f32 1.0, %v587
        %590 = vset.pattern.permute.xlu0 0
        %591 = vperm.xlu0 %590, %v588
        %v592 = vpop.permute.xlu0 %591
        %v594 = vmul.f32 %v267, %v592
        %v595 = vmul.f32 %v268, %v592
        %vm596 = vcmask 64512
        %v598 = vsel %vm596, 1.0, 0
        %600 = vmatpush.msra.mxu0 0.0
        %601 = vmatpush.msra.mxu0 0.0
        %602 = vmatpush.msra.mxu0 0.0
        %603 = vmatpush.msra.mxu0 0.0
        %604 = vmatpush.msra.mxu0 0.0
        %605 = vmatpush.msra.mxu0 0.0
        %606 = vmatpush.msra.mxu0 0.0
        %607 = vmatpush.msra.mxu0 0.0
        %608 = vmatpush.msra.mxu0 0.0
        %609 = vmatpush.msra.mxu0 0.0
        %610 = vmatpush.msra.mxu0 0.0
        %611 = vmatpush.msra.mxu0 0.0
        %612 = vmatpush.msra.mxu0 0.0
        %613 = vmatpush.msra.mxu0 0.0
        %614 = vmatpush.msra.mxu0 0.0
        %v615 = vand.u32 %v594, 4294901760
        %616 = vmatpush.msra.mxu0 %v615
        %v617 = vand.u32 %v598, 4294901760
        %v618 = vsub.f32 %v598, %v617
        %v619 = vand.u32 %v618, 4294901760
        %v620 = vsub.f32 %v618, %v619
        %v621 = vand.u32 %v620, 4294901760
        %622 = vmatmul.f32.gmra.mxu0 %v621
        %v623 = vpop.f32.mrf.mxu0
        %v624 = vadd.f32 0.0, %v623
        %625 = vdwg.mxu0
        %626 = vmatpush.msra.mxu0 0.0
        %627 = vmatpush.msra.mxu0 0.0
        %628 = vmatpush.msra.mxu0 0.0
        %629 = vmatpush.msra.mxu0 0.0
        %630 = vmatpush.msra.mxu0 0.0
        %631 = vmatpush.msra.mxu0 0.0
        %632 = vmatpush.msra.mxu0 0.0
        %633 = vmatpush.msra.mxu0 0.0
        %634 = vmatpush.msra.mxu0 0.0
        %635 = vmatpush.msra.mxu0 0.0
        %636 = vmatpush.msra.mxu0 0.0
        %637 = vmatpush.msra.mxu0 0.0
        %638 = vmatpush.msra.mxu0 0.0
        %639 = vmatpush.msra.mxu0 0.0
        %640 = vmatpush.msra.mxu0 0.0
        %v641 = vand.u32 %v594, 4294901760
        %v642 = vsub.f32 %v594, %v641
        %v643 = vand.u32 %v642, 4294901760
        %v644 = vsub.f32 %v642, %v643
        %v645 = vand.u32 %v644, 4294901760
        %646 = vmatpush.msra.mxu0 %v645
        %v647 = vand.u32 %v598, 4294901760
        %648 = vmatmul.f32.gmra.mxu0 %v647
        %v649 = vpop.f32.mrf.mxu0
        %v650 = vadd.f32 %v624, %v649
        %651 = vdwg.mxu0
        %652 = vmatpush.msra.mxu0 0.0
        %653 = vmatpush.msra.mxu0 0.0
        %654 = vmatpush.msra.mxu0 0.0
        %655 = vmatpush.msra.mxu0 0.0
        %656 = vmatpush.msra.mxu0 0.0
        %657 = vmatpush.msra.mxu0 0.0
        %658 = vmatpush.msra.mxu0 0.0
        %659 = vmatpush.msra.mxu0 0.0
        %660 = vmatpush.msra.mxu0 0.0
        %661 = vmatpush.msra.mxu0 0.0
        %662 = vmatpush.msra.mxu0 0.0
        %663 = vmatpush.msra.mxu0 0.0
        %664 = vmatpush.msra.mxu0 0.0
        %665 = vmatpush.msra.mxu0 0.0
        %666 = vmatpush.msra.mxu0 0.0
        %v667 = vand.u32 %v594, 4294901760
        %v668 = vsub.f32 %v594, %v667
        %669 = vmatpush.msra.mxu0 %v668
        %v670 = vand.u32 %v598, 4294901760
        %v671 = vsub.f32 %v598, %v670
        %672 = vmatmul.f32.gmra.mxu0 %v671
        %v673 = vpop.f32.mrf.mxu0
        %v674 = vadd.f32 %v650, %v673
        %675 = vdwg.mxu0
        %676 = vmatpush.msra.mxu0 0.0
        %677 = vmatpush.msra.mxu0 0.0
        %678 = vmatpush.msra.mxu0 0.0
        %679 = vmatpush.msra.mxu0 0.0
        %680 = vmatpush.msra.mxu0 0.0
        %681 = vmatpush.msra.mxu0 0.0
        %682 = vmatpush.msra.mxu0 0.0
        %683 = vmatpush.msra.mxu0 0.0
        %684 = vmatpush.msra.mxu0 0.0
        %685 = vmatpush.msra.mxu0 0.0
        %686 = vmatpush.msra.mxu0 0.0
        %687 = vmatpush.msra.mxu0 0.0
        %688 = vmatpush.msra.mxu0 0.0
        %689 = vmatpush.msra.mxu0 0.0
        %690 = vmatpush.msra.mxu0 0.0
        %v691 = vand.u32 %v594, 4294901760
        %692 = vmatpush.msra.mxu0 %v691
        %v693 = vand.u32 %v598, 4294901760
        %v694 = vsub.f32 %v598, %v693
        %v695 = vand.u32 %v694, 4294901760
        %696 = vmatmul.f32.gmra.mxu0 %v695
        %v697 = vpop.f32.mrf.mxu0
        %v698 = vadd.f32 %v674, %v697
        %699 = vdwg.mxu0
        %700 = vmatpush.msra.mxu0 0.0
        %701 = vmatpush.msra.mxu0 0.0
        %702 = vmatpush.msra.mxu0 0.0
        %703 = vmatpush.msra.mxu0 0.0
        %704 = vmatpush.msra.mxu0 0.0
        %705 = vmatpush.msra.mxu0 0.0
        %706 = vmatpush.msra.mxu0 0.0
        %707 = vmatpush.msra.mxu0 0.0
        %708 = vmatpush.msra.mxu0 0.0
        %709 = vmatpush.msra.mxu0 0.0
        %710 = vmatpush.msra.mxu0 0.0
        %711 = vmatpush.msra.mxu0 0.0
        %712 = vmatpush.msra.mxu0 0.0
        %713 = vmatpush.msra.mxu0 0.0
        %714 = vmatpush.msra.mxu0 0.0
        %v715 = vand.u32 %v594, 4294901760
        %v716 = vsub.f32 %v594, %v715
        %v717 = vand.u32 %v716, 4294901760
        %718 = vmatpush.msra.mxu0 %v717
        %v719 = vand.u32 %v598, 4294901760
        %720 = vmatmul.f32.gmra.mxu0 %v719
        %v721 = vpop.f32.mrf.mxu0
        %v722 = vadd.f32 %v698, %v721
        %723 = vdwg.mxu0
        %724 = vmatpush.msra.mxu0 0.0
        %725 = vmatpush.msra.mxu0 0.0
        %726 = vmatpush.msra.mxu0 0.0
        %727 = vmatpush.msra.mxu0 0.0
        %728 = vmatpush.msra.mxu0 0.0
        %729 = vmatpush.msra.mxu0 0.0
        %730 = vmatpush.msra.mxu0 0.0
        %731 = vmatpush.msra.mxu0 0.0
        %732 = vmatpush.msra.mxu0 0.0
        %733 = vmatpush.msra.mxu0 0.0
        %734 = vmatpush.msra.mxu0 0.0
        %735 = vmatpush.msra.mxu0 0.0
        %736 = vmatpush.msra.mxu0 0.0
        %737 = vmatpush.msra.mxu0 0.0
        %738 = vmatpush.msra.mxu0 0.0
        %v739 = vand.u32 %v594, 4294901760
        %740 = vmatpush.msra.mxu0 %v739
        %v741 = vand.u32 %v598, 4294901760
        %742 = vmatmul.f32.gmra.mxu0 %v741
        %v743 = vpop.f32.mrf.mxu0
        %v744 = vadd.f32 %v722, %v743
        %745 = vdwg.mxu0
        %746 = vmatpush.msra.mxu0 0.0
        %747 = vmatpush.msra.mxu0 0.0
        %748 = vmatpush.msra.mxu0 0.0
        %749 = vmatpush.msra.mxu0 0.0
        %750 = vmatpush.msra.mxu0 0.0
        %751 = vmatpush.msra.mxu0 0.0
        %752 = vmatpush.msra.mxu0 0.0
        %753 = vmatpush.msra.mxu0 0.0
        %754 = vmatpush.msra.mxu0 0.0
        %755 = vmatpush.msra.mxu0 0.0
        %756 = vmatpush.msra.mxu0 0.0
        %757 = vmatpush.msra.mxu0 0.0
        %758 = vmatpush.msra.mxu0 0.0
        %759 = vmatpush.msra.mxu0 0.0
        %760 = vmatpush.msra.mxu0 0.0
        %v761 = vand.u32 %v595, 4294901760
        %762 = vmatpush.msra.mxu0 %v761
        %v763 = vand.u32 %v598, 4294901760
        %v764 = vsub.f32 %v598, %v763
        %v765 = vand.u32 %v764, 4294901760
        %v766 = vsub.f32 %v764, %v765
        %v767 = vand.u32 %v766, 4294901760
        %768 = vmatmul.f32.gmra.mxu0 %v767
        %v769 = vpop.f32.mrf.mxu0
        %v770 = vadd.f32 0.0, %v769
        %771 = vdwg.mxu0
        %772 = vmatpush.msra.mxu0 0.0
        %773 = vmatpush.msra.mxu0 0.0
        %774 = vmatpush.msra.mxu0 0.0
        %775 = vmatpush.msra.mxu0 0.0
        %776 = vmatpush.msra.mxu0 0.0
        %777 = vmatpush.msra.mxu0 0.0
        %778 = vmatpush.msra.mxu0 0.0
        %779 = vmatpush.msra.mxu0 0.0
        %780 = vmatpush.msra.mxu0 0.0
        %781 = vmatpush.msra.mxu0 0.0
        %782 = vmatpush.msra.mxu0 0.0
        %783 = vmatpush.msra.mxu0 0.0
        %784 = vmatpush.msra.mxu0 0.0
        %785 = vmatpush.msra.mxu0 0.0
        %786 = vmatpush.msra.mxu0 0.0
        %v787 = vand.u32 %v595, 4294901760
        %v788 = vsub.f32 %v595, %v787
        %v789 = vand.u32 %v788, 4294901760
        %v790 = vsub.f32 %v788, %v789
        %v791 = vand.u32 %v790, 4294901760
        %792 = vmatpush.msra.mxu0 %v791
        %v793 = vand.u32 %v598, 4294901760
        %794 = vmatmul.f32.gmra.mxu0 %v793
        %v795 = vpop.f32.mrf.mxu0
        %v796 = vadd.f32 %v770, %v795
        %797 = vdwg.mxu0
        %798 = vmatpush.msra.mxu0 0.0
        %799 = vmatpush.msra.mxu0 0.0
        %800 = vmatpush.msra.mxu0 0.0
        %801 = vmatpush.msra.mxu0 0.0
        %802 = vmatpush.msra.mxu0 0.0
        %803 = vmatpush.msra.mxu0 0.0
        %804 = vmatpush.msra.mxu0 0.0
        %805 = vmatpush.msra.mxu0 0.0
        %806 = vmatpush.msra.mxu0 0.0
        %807 = vmatpush.msra.mxu0 0.0
        %808 = vmatpush.msra.mxu0 0.0
        %809 = vmatpush.msra.mxu0 0.0
        %810 = vmatpush.msra.mxu0 0.0
        %811 = vmatpush.msra.mxu0 0.0
        %812 = vmatpush.msra.mxu0 0.0
        %v813 = vand.u32 %v595, 4294901760
        %v814 = vsub.f32 %v595, %v813
        %815 = vmatpush.msra.mxu0 %v814
        %v816 = vand.u32 %v598, 4294901760
        %v817 = vsub.f32 %v598, %v816
        %818 = vmatmul.f32.gmra.mxu0 %v817
        %v819 = vpop.f32.mrf.mxu0
        %v820 = vadd.f32 %v796, %v819
        %821 = vdwg.mxu0
        %822 = vmatpush.msra.mxu0 0.0
        %823 = vmatpush.msra.mxu0 0.0
        %824 = vmatpush.msra.mxu0 0.0
        %825 = vmatpush.msra.mxu0 0.0
        %826 = vmatpush.msra.mxu0 0.0
        %827 = vmatpush.msra.mxu0 0.0
        %828 = vmatpush.msra.mxu0 0.0
        %829 = vmatpush.msra.mxu0 0.0
        %830 = vmatpush.msra.mxu0 0.0
        %831 = vmatpush.msra.mxu0 0.0
        %832 = vmatpush.msra.mxu0 0.0
        %833 = vmatpush.msra.mxu0 0.0
        %834 = vmatpush.msra.mxu0 0.0
        %835 = vmatpush.msra.mxu0 0.0
        %836 = vmatpush.msra.mxu0 0.0
        %v837 = vand.u32 %v595, 4294901760
        %838 = vmatpush.msra.mxu0 %v837
        %v839 = vand.u32 %v598, 4294901760
        %v840 = vsub.f32 %v598, %v839
        %v841 = vand.u32 %v840, 4294901760
        %842 = vmatmul.f32.gmra.mxu0 %v841
        %v843 = vpop.f32.mrf.mxu0
        %v844 = vadd.f32 %v820, %v843
        %845 = vdwg.mxu0
        %846 = vmatpush.msra.mxu0 0.0
        %847 = vmatpush.msra.mxu0 0.0
        %848 = vmatpush.msra.mxu0 0.0
        %849 = vmatpush.msra.mxu0 0.0
        %850 = vmatpush.msra.mxu0 0.0
        %851 = vmatpush.msra.mxu0 0.0
        %852 = vmatpush.msra.mxu0 0.0
        %853 = vmatpush.msra.mxu0 0.0
        %854 = vmatpush.msra.mxu0 0.0
        %855 = vmatpush.msra.mxu0 0.0
        %856 = vmatpush.msra.mxu0 0.0
        %857 = vmatpush.msra.mxu0 0.0
        %858 = vmatpush.msra.mxu0 0.0
        %859 = vmatpush.msra.mxu0 0.0
        %860 = vmatpush.msra.mxu0 0.0
        %v861 = vand.u32 %v595, 4294901760
        %v862 = vsub.f32 %v595, %v861
        %v863 = vand.u32 %v862, 4294901760
        %864 = vmatpush.msra.mxu0 %v863
        %v865 = vand.u32 %v598, 4294901760
        %866 = vmatmul.f32.gmra.mxu0 %v865
        %v867 = vpop.f32.mrf.mxu0
        %v868 = vadd.f32 %v844, %v867
        %869 = vdwg.mxu0
        %870 = vmatpush.msra.mxu0 0.0
        %871 = vmatpush.msra.mxu0 0.0
        %872 = vmatpush.msra.mxu0 0.0
        %873 = vmatpush.msra.mxu0 0.0
        %874 = vmatpush.msra.mxu0 0.0
        %875 = vmatpush.msra.mxu0 0.0
        %876 = vmatpush.msra.mxu0 0.0
        %877 = vmatpush.msra.mxu0 0.0
        %878 = vmatpush.msra.mxu0 0.0
        %879 = vmatpush.msra.mxu0 0.0
        %880 = vmatpush.msra.mxu0 0.0
        %881 = vmatpush.msra.mxu0 0.0
        %882 = vmatpush.msra.mxu0 0.0
        %883 = vmatpush.msra.mxu0 0.0
        %884 = vmatpush.msra.mxu0 0.0
        %v885 = vand.u32 %v595, 4294901760
        %886 = vmatpush.msra.mxu0 %v885
        %v887 = vand.u32 %v598, 4294901760
        %888 = vmatmul.f32.gmra.mxu0 %v887
        %v889 = vpop.f32.mrf.mxu0
        %v890 = vadd.f32 %v868, %v889
        %891 = vdwg.mxu0
        %v892 = vmul.f32 %v744, 0.125
        %v893 = vmul.f32 %v890, 0.125
        %v894 = vrot.slane %v594, 4
        %v895 = vmax.f32 %v594, %v894
        %v896 = vrot.slane %v895, 2
        %v897 = vmax.f32 %v895, %v896
        %v898 = vrot.slane %v897, 1
        %v899 = vmax.f32 %v897, %v898
        %v900 = vrot.slane %v595, 4
        %v901 = vmax.f32 %v595, %v900
        %v902 = vrot.slane %v901, 2
        %v903 = vmax.f32 %v901, %v902
        %v904 = vrot.slane %v903, 1
        %v905 = vmax.f32 %v903, %v904
        %v906 = vsel %vm539, %v892, %v899
        %v907 = vsel %vm539, %v893, %v905
        %910 = vrot.lane.b32.xlu0 %v906, 51
        %v911 = vpop.permute.xlu0 %910
        %912 = vrot.lane.b32.xlu0 %v907, 51
        %v913 = vpop.permute.xlu0 %912
        %vm914 = vcmask 416768
        %v915 = vsel %vm914, %v911, %v913
        %v919 = vsel %vm914, 0.0, %v911
        %v920 = vsel %vm914, %v913, 0.0
        %922 = vset.pattern.permute.xlu0 0
        %923 = vperm.xlu0 %922, %v266
        %v924 = vpop.permute.xlu0 %923
        %v926 = vmul.f32 %v924, %v919
        %v927 = vmul.f32 %v924, %v915
        %v928 = vadd.f32 %v926, 0.0
        %v929 = vadd.f32 %v927, 0.0
        %930 = vset.pattern.permute.xlu0 7
        %931 = vperm.xlu0 %930, %v266
        %v932 = vpop.permute.xlu0 %931
        %v934 = vmul.f32 %v932, %v919
        %v935 = vmul.f32 %v932, %v915
        %v936 = vmul.f32 %v932, %v920
        %940 = vrot.lane.b32.xlu0 %v934, 112
        %v941 = vpop.permute.xlu0 %940
        %942 = vrot.lane.b32.xlu0 %v935, 112
        %v943 = vpop.permute.xlu0 %942
        %944 = vrot.lane.b32.xlu0 %v936, 112
        %v945 = vpop.permute.xlu0 %944
        %vm946 = vcmask 916480
        %v947 = vsel %vm946, %v941, %v943
        %v948 = vsel %vm946, %v943, %v945
        %v951 = vadd.f32 %v928, %v947
        %v952 = vadd.f32 %v929, %v948
        %953 = vset.pattern.permute.xlu0 14
        %954 = vperm.xlu0 %953, %v266
        %v955 = vpop.permute.xlu0 %954
        %v957 = vmul.f32 %v955, %v919
        %v958 = vmul.f32 %v955, %v915
        %v959 = vmul.f32 %v955, %v920
        %963 = vrot.lane.b32.xlu0 %v957, 96
        %v964 = vpop.permute.xlu0 %963
        %965 = vrot.lane.b32.xlu0 %v958, 96
        %v966 = vpop.permute.xlu0 %965
        %967 = vrot.lane.b32.xlu0 %v959, 96
        %v968 = vpop.permute.xlu0 %967
        %vm969 = vcmask 785408
        %v970 = vsel %vm969, %v964, %v966
        %v971 = vsel %vm969, %v966, %v968
        %v974 = vadd.f32 %v951, %v970
        %v975 = vadd.f32 %v952, %v971
        %976 = vset.pattern.permute.xlu0 21
        %977 = vperm.xlu0 %976, %v266
        %v978 = vpop.permute.xlu0 %977
        %v980 = vmul.f32 %v978, %v919
        %v981 = vmul.f32 %v978, %v915
        %v982 = vmul.f32 %v978, %v920
        %986 = vrot.lane.b32.xlu0 %v980, 80
        %v987 = vpop.permute.xlu0 %986
        %988 = vrot.lane.b32.xlu0 %v981, 80
        %v989 = vpop.permute.xlu0 %988
        %990 = vrot.lane.b32.xlu0 %v982, 80
        %v991 = vpop.permute.xlu0 %990
        %vm992 = vcmask 654336
        %v993 = vsel %vm992, %v987, %v989
        %v994 = vsel %vm992, %v989, %v991
        %v997 = vadd.f32 %v974, %v993
        %v998 = vadd.f32 %v975, %v994
        %999 = vset.pattern.permute.xlu0 28
        %1000 = vperm.xlu0 %999, %v266
        %v1001 = vpop.permute.xlu0 %1000
        %v1003 = vmul.f32 %v1001, %v919
        %v1004 = vmul.f32 %v1001, %v915
        %v1005 = vmul.f32 %v1001, %v920
        %1009 = vrot.lane.b32.xlu0 %v1003, 64
        %v1010 = vpop.permute.xlu0 %1009
        %1011 = vrot.lane.b32.xlu0 %v1004, 64
        %v1012 = vpop.permute.xlu0 %1011
        %1013 = vrot.lane.b32.xlu0 %v1005, 64
        %v1014 = vpop.permute.xlu0 %1013
        %vm1015 = vcmask 523264
        %v1016 = vsel %vm1015, %v1010, %v1012
        %v1017 = vsel %vm1015, %v1012, %v1014
        %v1020 = vadd.f32 %v997, %v1016
        %v1021 = vadd.f32 %v998, %v1017
        %1022 = vset.pattern.permute.xlu0 35
        %1023 = vperm.xlu0 %1022, %v266
        %v1024 = vpop.permute.xlu0 %1023
        %v1026 = vmul.f32 %v1024, %v919
        %v1027 = vmul.f32 %v1024, %v915
        %v1028 = vmul.f32 %v1024, %v920
        %1032 = vrot.lane.b32.xlu0 %v1026, 48
        %v1033 = vpop.permute.xlu0 %1032
        %1034 = vrot.lane.b32.xlu0 %v1027, 48
        %v1035 = vpop.permute.xlu0 %1034
        %1036 = vrot.lane.b32.xlu0 %v1028, 48
        %v1037 = vpop.permute.xlu0 %1036
        %vm1038 = vcmask 392192
        %v1039 = vsel %vm1038, %v1033, %v1035
        %v1040 = vsel %vm1038, %v1035, %v1037
        %v1043 = vadd.f32 %v1020, %v1039
        %v1044 = vadd.f32 %v1021, %v1040
        %1045 = vset.pattern.permute.xlu0 42
        %1046 = vperm.xlu0 %1045, %v266
        %v1047 = vpop.permute.xlu0 %1046
        %v1049 = vmul.f32 %v1047, %v919
        %v1050 = vmul.f32 %v1047, %v915
        %v1051 = vmul.f32 %v1047, %v920
        %1055 = vrot.lane.b32.xlu0 %v1049, 32
        %v1056 = vpop.permute.xlu0 %1055
        %1057 = vrot.lane.b32.xlu0 %v1050, 32
        %v1058 = vpop.permute.xlu0 %1057
        %1059 = vrot.lane.b32.xlu0 %v1051, 32
        %v1060 = vpop.permute.xlu0 %1059
        %vm1061 = vcmask 261120
        %v1062 = vsel %vm1061, %v1056, %v1058
        %v1063 = vsel %vm1061, %v1058, %v1060
        %v1066 = vadd.f32 %v1043, %v1062
        %v1067 = vadd.f32 %v1044, %v1063
        %v1068 = vsel %vm218, 1, 0
        %v1069 = vsel %vm219, 1, 0
        %vm1070 = vcmp.eq.s32.totalorder %v1068, 1
        %vm1071 = vcmp.eq.s32.totalorder %v1069, 1
        %v1072 = vsel %vm1070, %v1066, 0.0
        %v1073 = vsel %vm1071, %v1067, 0.0
        %v1074 = vadd.f32 %v1072, 0.0
        %v1075 = vadd.f32 %v1073, 0.0
        %1076 = vset.pattern.permute.xlu0 1
        %1077 = vperm.xlu0 %1076, %v266
        %v1078 = vpop.permute.xlu0 %1077
        %v1080 = vmul.f32 %v1078, %v919
        %v1081 = vmul.f32 %v1078, %v915
        %v1082 = vmul.f32 %v1078, %v920
        %v1083 = vadd.f32 %v1080, 0.0
        %v1084 = vadd.f32 %v1081, 0.0
        %v1085 = vadd.f32 %v1082, 0.0
        %1086 = vset.pattern.permute.xlu0 8
        %1087 = vperm.xlu0 %1086, %v266
        %v1088 = vpop.permute.xlu0 %1087
        %v1090 = vmul.f32 %v1088, %v919
        %v1091 = vmul.f32 %v1088, %v915
        %v1092 = vmul.f32 %v1088, %v920
        %1096 = vrot.lane.b32.xlu0 %v1090, 112
        %v1097 = vpop.permute.xlu0 %1096
        %1098 = vrot.lane.b32.xlu0 %v1091, 112
        %v1099 = vpop.permute.xlu0 %1098
        %1100 = vrot.lane.b32.xlu0 %v1092, 112
        %v1101 = vpop.permute.xlu0 %1100
        %v1102 = vsel %vm946, %v1097, %v1099
        %v1103 = vsel %vm946, %v1099, %v1101
        %v1107 = vadd.f32 %v1083, %v1102
        %v1108 = vadd.f32 %v1084, %v1103
        %v1109 = vadd.f32 %v1085, %v1101
        %1110 = vset.pattern.permute.xlu0 15
        %1111 = vperm.xlu0 %1110, %v266
        %v1112 = vpop.permute.xlu0 %1111
        %v1114 = vmul.f32 %v1112, %v919
        %v1115 = vmul.f32 %v1112, %v915
        %v1116 = vmul.f32 %v1112, %v920
        %1120 = vrot.lane.b32.xlu0 %v1114, 96
        %v1121 = vpop.permute.xlu0 %1120
        %1122 = vrot.lane.b32.xlu0 %v1115, 96
        %v1123 = vpop.permute.xlu0 %1122
        %1124 = vrot.lane.b32.xlu0 %v1116, 96
        %v1125 = vpop.permute.xlu0 %1124
        %v1126 = vsel %vm969, %v1121, %v1123
        %v1127 = vsel %vm969, %v1123, %v1125
        %v1131 = vadd.f32 %v1107, %v1126
        %v1132 = vadd.f32 %v1108, %v1127
        %v1133 = vadd.f32 %v1109, %v1125
        %1134 = vset.pattern.permute.xlu0 22
        %1135 = vperm.xlu0 %1134, %v266
        %v1136 = vpop.permute.xlu0 %1135
        %v1138 = vmul.f32 %v1136, %v919
        %v1139 = vmul.f32 %v1136, %v915
        %v1140 = vmul.f32 %v1136, %v920
        %1144 = vrot.lane.b32.xlu0 %v1138, 80
        %v1145 = vpop.permute.xlu0 %1144
        %1146 = vrot.lane.b32.xlu0 %v1139, 80
        %v1147 = vpop.permute.xlu0 %1146
        %1148 = vrot.lane.b32.xlu0 %v1140, 80
        %v1149 = vpop.permute.xlu0 %1148
        %v1150 = vsel %vm992, %v1145, %v1147
        %v1151 = vsel %vm992, %v1147, %v1149
        %v1155 = vadd.f32 %v1131, %v1150
        %v1156 = vadd.f32 %v1132, %v1151
        %v1157 = vadd.f32 %v1133, %v1149
        %1158 = vset.pattern.permute.xlu0 29
        %1159 = vperm.xlu0 %1158, %v266
        %v1160 = vpop.permute.xlu0 %1159
        %v1162 = vmul.f32 %v1160, %v919
        %v1163 = vmul.f32 %v1160, %v915
        %v1164 = vmul.f32 %v1160, %v920
        %1168 = vrot.lane.b32.xlu0 %v1162, 64
        %v1169 = vpop.permute.xlu0 %1168
        %1170 = vrot.lane.b32.xlu0 %v1163, 64
        %v1171 = vpop.permute.xlu0 %1170
        %1172 = vrot.lane.b32.xlu0 %v1164, 64
        %v1173 = vpop.permute.xlu0 %1172
        %v1174 = vsel %vm1015, %v1169, %v1171
        %v1175 = vsel %vm1015, %v1171, %v1173
        %v1179 = vadd.f32 %v1155, %v1174
        %v1180 = vadd.f32 %v1156, %v1175
        %v1181 = vadd.f32 %v1157, %v1173
        %1182 = vset.pattern.permute.xlu0 36
        %1183 = vperm.xlu0 %1182, %v266
        %v1184 = vpop.permute.xlu0 %1183
        %v1186 = vmul.f32 %v1184, %v919
        %v1187 = vmul.f32 %v1184, %v915
        %v1188 = vmul.f32 %v1184, %v920
        %1192 = vrot.lane.b32.xlu0 %v1186, 48
        %v1193 = vpop.permute.xlu0 %1192
        %1194 = vrot.lane.b32.xlu0 %v1187, 48
        %v1195 = vpop.permute.xlu0 %1194
        %1196 = vrot.lane.b32.xlu0 %v1188, 48
        %v1197 = vpop.permute.xlu0 %1196
        %v1198 = vsel %vm1038, %v1193, %v1195
        %v1199 = vsel %vm1038, %v1195, %v1197
        %v1203 = vadd.f32 %v1179, %v1198
        %v1204 = vadd.f32 %v1180, %v1199
        %v1205 = vadd.f32 %v1181, %v1197
        %1206 = vset.pattern.permute.xlu0 43
        %1207 = vperm.xlu0 %1206, %v266
        %v1208 = vpop.permute.xlu0 %1207
        %v1210 = vmul.f32 %v1208, %v919
        %v1211 = vmul.f32 %v1208, %v915
        %v1212 = vmul.f32 %v1208, %v920
        %1216 = vrot.lane.b32.xlu0 %v1210, 32
        %v1217 = vpop.permute.xlu0 %1216
        %1218 = vrot.lane.b32.xlu0 %v1211, 32
        %v1219 = vpop.permute.xlu0 %1218
        %1220 = vrot.lane.b32.xlu0 %v1212, 32
        %v1221 = vpop.permute.xlu0 %1220
        %v1222 = vsel %vm1061, %v1217, %v1219
        %v1223 = vsel %vm1061, %v1219, %v1221
        %v1227 = vadd.f32 %v1203, %v1222
        %v1228 = vadd.f32 %v1204, %v1223
        %v1229 = vadd.f32 %v1205, %v1221
        %v1230 = vsel %vm226, 1, 0
        %v1231 = vsel %vm227, 1, 0
        %vm1232 = vcmp.eq.s32.totalorder %v1230, 1
        %vm1233 = vcmp.eq.s32.totalorder %v1231, 1
        %1237 = vrot.lane.b32.xlu0 %v1227, 127
        %v1238 = vpop.permute.xlu0 %1237
        %1239 = vrot.lane.b32.xlu0 %v1228, 127
        %v1240 = vpop.permute.xlu0 %1239
        %1241 = vrot.lane.b32.xlu0 %v1229, 127
        %v1242 = vpop.permute.xlu0 %1241
        %vm1243 = vcmask 1039360
        %v1244 = vsel %vm1243, %v1238, %v1240
        %v1245 = vsel %vm1243, %v1240, %v1242
        %v1248 = vsel %vm1232, %v1244, 0.0
        %v1249 = vsel %vm1233, %v1245, 0.0
        %v1250 = vadd.f32 %v1074, %v1248
        %v1251 = vadd.f32 %v1075, %v1249
        %1252 = vset.pattern.permute.xlu0 2
        %1253 = vperm.xlu0 %1252, %v266
        %v1254 = vpop.permute.xlu0 %1253
        %v1256 = vmul.f32 %v1254, %v919
        %v1257 = vmul.f32 %v1254, %v915
        %v1258 = vmul.f32 %v1254, %v920
        %v1259 = vadd.f32 %v1256, 0.0
        %v1260 = vadd.f32 %v1257, 0.0
        %v1261 = vadd.f32 %v1258, 0.0
        %1262 = vset.pattern.permute.xlu0 9
        %1263 = vperm.xlu0 %1262, %v266
        %v1264 = vpop.permute.xlu0 %1263
        %v1266 = vmul.f32 %v1264, %v919
        %v1267 = vmul.f32 %v1264, %v915
        %v1268 = vmul.f32 %v1264, %v920
        %1272 = vrot.lane.b32.xlu0 %v1266, 112
        %v1273 = vpop.permute.xlu0 %1272
        %1274 = vrot.lane.b32.xlu0 %v1267, 112
        %v1275 = vpop.permute.xlu0 %1274
        %1276 = vrot.lane.b32.xlu0 %v1268, 112
        %v1277 = vpop.permute.xlu0 %1276
        %v1278 = vsel %vm946, %v1273, %v1275
        %v1279 = vsel %vm946, %v1275, %v1277
        %v1283 = vadd.f32 %v1259, %v1278
        %v1284 = vadd.f32 %v1260, %v1279
        %v1285 = vadd.f32 %v1261, %v1277
        %1286 = vset.pattern.permute.xlu0 16
        %1287 = vperm.xlu0 %1286, %v266
        %v1288 = vpop.permute.xlu0 %1287
        %v1290 = vmul.f32 %v1288, %v919
        %v1291 = vmul.f32 %v1288, %v915
        %v1292 = vmul.f32 %v1288, %v920
        %1296 = vrot.lane.b32.xlu0 %v1290, 96
        %v1297 = vpop.permute.xlu0 %1296
        %1298 = vrot.lane.b32.xlu0 %v1291, 96
        %v1299 = vpop.permute.xlu0 %1298
        %1300 = vrot.lane.b32.xlu0 %v1292, 96
        %v1301 = vpop.permute.xlu0 %1300
        %v1302 = vsel %vm969, %v1297, %v1299
        %v1303 = vsel %vm969, %v1299, %v1301
        %v1307 = vadd.f32 %v1283, %v1302
        %v1308 = vadd.f32 %v1284, %v1303
        %v1309 = vadd.f32 %v1285, %v1301
        %1310 = vset.pattern.permute.xlu0 23
        %1311 = vperm.xlu0 %1310, %v266
        %v1312 = vpop.permute.xlu0 %1311
        %v1314 = vmul.f32 %v1312, %v919
        %v1315 = vmul.f32 %v1312, %v915
        %v1316 = vmul.f32 %v1312, %v920
        %1320 = vrot.lane.b32.xlu0 %v1314, 80
        %v1321 = vpop.permute.xlu0 %1320
        %1322 = vrot.lane.b32.xlu0 %v1315, 80
        %v1323 = vpop.permute.xlu0 %1322
        %1324 = vrot.lane.b32.xlu0 %v1316, 80
        %v1325 = vpop.permute.xlu0 %1324
        %v1326 = vsel %vm992, %v1321, %v1323
        %v1327 = vsel %vm992, %v1323, %v1325
        %v1331 = vadd.f32 %v1307, %v1326
        %v1332 = vadd.f32 %v1308, %v1327
        %v1333 = vadd.f32 %v1309, %v1325
        %1334 = vset.pattern.permute.xlu0 30
        %1335 = vperm.xlu0 %1334, %v266
        %v1336 = vpop.permute.xlu0 %1335
        %v1338 = vmul.f32 %v1336, %v919
        %v1339 = vmul.f32 %v1336, %v915
        %v1340 = vmul.f32 %v1336, %v920
        %1344 = vrot.lane.b32.xlu0 %v1338, 64
        %v1345 = vpop.permute.xlu0 %1344
        %1346 = vrot.lane.b32.xlu0 %v1339, 64
        %v1347 = vpop.permute.xlu0 %1346
        %1348 = vrot.lane.b32.xlu0 %v1340, 64
        %v1349 = vpop.permute.xlu0 %1348
        %v1350 = vsel %vm1015, %v1345, %v1347
        %v1351 = vsel %vm1015, %v1347, %v1349
        %v1355 = vadd.f32 %v1331, %v1350
        %v1356 = vadd.f32 %v1332, %v1351
        %v1357 = vadd.f32 %v1333, %v1349
        %1358 = vset.pattern.permute.xlu0 37
        %1359 = vperm.xlu0 %1358, %v266
        %v1360 = vpop.permute.xlu0 %1359
        %v1362 = vmul.f32 %v1360, %v919
        %v1363 = vmul.f32 %v1360, %v915
        %v1364 = vmul.f32 %v1360, %v920
        %1368 = vrot.lane.b32.xlu0 %v1362, 48
        %v1369 = vpop.permute.xlu0 %1368
        %1370 = vrot.lane.b32.xlu0 %v1363, 48
        %v1371 = vpop.permute.xlu0 %1370
        %1372 = vrot.lane.b32.xlu0 %v1364, 48
        %v1373 = vpop.permute.xlu0 %1372
        %v1374 = vsel %vm1038, %v1369, %v1371
        %v1375 = vsel %vm1038, %v1371, %v1373
        %v1379 = vadd.f32 %v1355, %v1374
        %v1380 = vadd.f32 %v1356, %v1375
        %v1381 = vadd.f32 %v1357, %v1373
        %1382 = vset.pattern.permute.xlu0 44
        %1383 = vperm.xlu0 %1382, %v266
        %v1384 = vpop.permute.xlu0 %1383
        %v1386 = vmul.f32 %v1384, %v919
        %v1387 = vmul.f32 %v1384, %v915
        %v1388 = vmul.f32 %v1384, %v920
        %1392 = vrot.lane.b32.xlu0 %v1386, 32
        %v1393 = vpop.permute.xlu0 %1392
        %1394 = vrot.lane.b32.xlu0 %v1387, 32
        %v1395 = vpop.permute.xlu0 %1394
        %1396 = vrot.lane.b32.xlu0 %v1388, 32
        %v1397 = vpop.permute.xlu0 %1396
        %v1398 = vsel %vm1061, %v1393, %v1395
        %v1399 = vsel %vm1061, %v1395, %v1397
        %v1403 = vadd.f32 %v1379, %v1398
        %v1404 = vadd.f32 %v1380, %v1399
        %v1405 = vadd.f32 %v1381, %v1397
        %v1406 = vsel %vm234, 1, 0
        %v1407 = vsel %vm235, 1, 0
        %vm1408 = vcmp.eq.s32.totalorder %v1406, 1
        %vm1409 = vcmp.eq.s32.totalorder %v1407, 1
        %1413 = vrot.lane.b32.xlu0 %v1403, 126
        %v1414 = vpop.permute.xlu0 %1413
        %1415 = vrot.lane.b32.xlu0 %v1404, 126
        %v1416 = vpop.permute.xlu0 %1415
        %1417 = vrot.lane.b32.xlu0 %v1405, 126
        %v1418 = vpop.permute.xlu0 %1417
        %vm1419 = vcmask 1031168
        %v1420 = vsel %vm1419, %v1414, %v1416
        %v1421 = vsel %vm1419, %v1416, %v1418
        %v1424 = vsel %vm1408, %v1420, 0.0
        %v1425 = vsel %vm1409, %v1421, 0.0
        %v1426 = vadd.f32 %v1250, %v1424
        %v1427 = vadd.f32 %v1251, %v1425
        %1428 = vset.pattern.permute.xlu0 3
        %1429 = vperm.xlu0 %1428, %v266
        %v1430 = vpop.permute.xlu0 %1429
        %v1432 = vmul.f32 %v1430, %v919
        %v1433 = vmul.f32 %v1430, %v915
        %v1434 = vmul.f32 %v1430, %v920
        %v1435 = vadd.f32 %v1432, 0.0
        %v1436 = vadd.f32 %v1433, 0.0
        %v1437 = vadd.f32 %v1434, 0.0
        %1438 = vset.pattern.permute.xlu0 10
        %1439 = vperm.xlu0 %1438, %v266
        %v1440 = vpop.permute.xlu0 %1439
        %v1442 = vmul.f32 %v1440, %v919
        %v1443 = vmul.f32 %v1440, %v915
        %v1444 = vmul.f32 %v1440, %v920
        %1448 = vrot.lane.b32.xlu0 %v1442, 112
        %v1449 = vpop.permute.xlu0 %1448
        %1450 = vrot.lane.b32.xlu0 %v1443, 112
        %v1451 = vpop.permute.xlu0 %1450
        %1452 = vrot.lane.b32.xlu0 %v1444, 112
        %v1453 = vpop.permute.xlu0 %1452
        %v1454 = vsel %vm946, %v1449, %v1451
        %v1455 = vsel %vm946, %v1451, %v1453
        %v1459 = vadd.f32 %v1435, %v1454
        %v1460 = vadd.f32 %v1436, %v1455
        %v1461 = vadd.f32 %v1437, %v1453
        %1462 = vset.pattern.permute.xlu0 17
        %1463 = vperm.xlu0 %1462, %v266
        %v1464 = vpop.permute.xlu0 %1463
        %v1466 = vmul.f32 %v1464, %v919
        %v1467 = vmul.f32 %v1464, %v915
        %v1468 = vmul.f32 %v1464, %v920
        %1472 = vrot.lane.b32.xlu0 %v1466, 96
        %v1473 = vpop.permute.xlu0 %1472
        %1474 = vrot.lane.b32.xlu0 %v1467, 96
        %v1475 = vpop.permute.xlu0 %1474
        %1476 = vrot.lane.b32.xlu0 %v1468, 96
        %v1477 = vpop.permute.xlu0 %1476
        %v1478 = vsel %vm969, %v1473, %v1475
        %v1479 = vsel %vm969, %v1475, %v1477
        %v1483 = vadd.f32 %v1459, %v1478
        %v1484 = vadd.f32 %v1460, %v1479
        %v1485 = vadd.f32 %v1461, %v1477
        %1486 = vset.pattern.permute.xlu0 24
        %1487 = vperm.xlu0 %1486, %v266
        %v1488 = vpop.permute.xlu0 %1487
        %v1490 = vmul.f32 %v1488, %v919
        %v1491 = vmul.f32 %v1488, %v915
        %v1492 = vmul.f32 %v1488, %v920
        %1496 = vrot.lane.b32.xlu0 %v1490, 80
        %v1497 = vpop.permute.xlu0 %1496
        %1498 = vrot.lane.b32.xlu0 %v1491, 80
        %v1499 = vpop.permute.xlu0 %1498
        %1500 = vrot.lane.b32.xlu0 %v1492, 80
        %v1501 = vpop.permute.xlu0 %1500
        %v1502 = vsel %vm992, %v1497, %v1499
        %v1503 = vsel %vm992, %v1499, %v1501
        %v1507 = vadd.f32 %v1483, %v1502
        %v1508 = vadd.f32 %v1484, %v1503
        %v1509 = vadd.f32 %v1485, %v1501
        %1510 = vset.pattern.permute.xlu0 31
        %1511 = vperm.xlu0 %1510, %v266
        %v1512 = vpop.permute.xlu0 %1511
        %v1514 = vmul.f32 %v1512, %v919
        %v1515 = vmul.f32 %v1512, %v915
        %v1516 = vmul.f32 %v1512, %v920
        %1520 = vrot.lane.b32.xlu0 %v1514, 64
        %v1521 = vpop.permute.xlu0 %1520
        %1522 = vrot.lane.b32.xlu0 %v1515, 64
        %v1523 = vpop.permute.xlu0 %1522
        %1524 = vrot.lane.b32.xlu0 %v1516, 64
        %v1525 = vpop.permute.xlu0 %1524
        %v1526 = vsel %vm1015, %v1521, %v1523
        %v1527 = vsel %vm1015, %v1523, %v1525
        %v1531 = vadd.f32 %v1507, %v1526
        %v1532 = vadd.f32 %v1508, %v1527
        %v1533 = vadd.f32 %v1509, %v1525
        %1534 = vset.pattern.permute.xlu0 38
        %1535 = vperm.xlu0 %1534, %v266
        %v1536 = vpop.permute.xlu0 %1535
        %v1538 = vmul.f32 %v1536, %v919
        %v1539 = vmul.f32 %v1536, %v915
        %v1540 = vmul.f32 %v1536, %v920
        %1544 = vrot.lane.b32.xlu0 %v1538, 48
        %v1545 = vpop.permute.xlu0 %1544
        %1546 = vrot.lane.b32.xlu0 %v1539, 48
        %v1547 = vpop.permute.xlu0 %1546
        %1548 = vrot.lane.b32.xlu0 %v1540, 48
        %v1549 = vpop.permute.xlu0 %1548
        %v1550 = vsel %vm1038, %v1545, %v1547
        %v1551 = vsel %vm1038, %v1547, %v1549
        %v1555 = vadd.f32 %v1531, %v1550
        %v1556 = vadd.f32 %v1532, %v1551
        %v1557 = vadd.f32 %v1533, %v1549
        %1558 = vset.pattern.permute.xlu0 45
        %1559 = vperm.xlu0 %1558, %v266
        %v1560 = vpop.permute.xlu0 %1559
        %v1562 = vmul.f32 %v1560, %v919
        %v1563 = vmul.f32 %v1560, %v915
        %v1564 = vmul.f32 %v1560, %v920
        %1568 = vrot.lane.b32.xlu0 %v1562, 32
        %v1569 = vpop.permute.xlu0 %1568
        %1570 = vrot.lane.b32.xlu0 %v1563, 32
        %v1571 = vpop.permute.xlu0 %1570
        %1572 = vrot.lane.b32.xlu0 %v1564, 32
        %v1573 = vpop.permute.xlu0 %1572
        %v1574 = vsel %vm1061, %v1569, %v1571
        %v1575 = vsel %vm1061, %v1571, %v1573
        %v1579 = vadd.f32 %v1555, %v1574
        %v1580 = vadd.f32 %v1556, %v1575
        %v1581 = vadd.f32 %v1557, %v1573
        %v1582 = vsel %vm240, 1, 0
        %v1583 = vsel %vm241, 1, 0
        %vm1584 = vcmp.eq.s32.totalorder %v1582, 1
        %vm1585 = vcmp.eq.s32.totalorder %v1583, 1
        %1589 = vrot.lane.b32.xlu0 %v1579, 125
        %v1590 = vpop.permute.xlu0 %1589
        %1591 = vrot.lane.b32.xlu0 %v1580, 125
        %v1592 = vpop.permute.xlu0 %1591
        %1593 = vrot.lane.b32.xlu0 %v1581, 125
        %v1594 = vpop.permute.xlu0 %1593
        %vm1595 = vcmask 1022976
        %v1596 = vsel %vm1595, %v1590, %v1592
        %v1597 = vsel %vm1595, %v1592, %v1594
        %v1600 = vsel %vm1584, %v1596, 0.0
        %v1601 = vsel %vm1585, %v1597, 0.0
        %v1602 = vadd.f32 %v1426, %v1600
        %v1603 = vadd.f32 %v1427, %v1601
        %1604 = vset.pattern.permute.xlu0 4
        %1605 = vperm.xlu0 %1604, %v266
        %v1606 = vpop.permute.xlu0 %1605
        %v1608 = vmul.f32 %v1606, %v919
        %v1609 = vmul.f32 %v1606, %v915
        %v1610 = vmul.f32 %v1606, %v920
        %v1611 = vadd.f32 %v1608, 0.0
        %v1612 = vadd.f32 %v1609, 0.0
        %v1613 = vadd.f32 %v1610, 0.0
        %1614 = vset.pattern.permute.xlu0 11
        %1615 = vperm.xlu0 %1614, %v266
        %v1616 = vpop.permute.xlu0 %1615
        %v1618 = vmul.f32 %v1616, %v919
        %v1619 = vmul.f32 %v1616, %v915
        %v1620 = vmul.f32 %v1616, %v920
        %1624 = vrot.lane.b32.xlu0 %v1618, 112
        %v1625 = vpop.permute.xlu0 %1624
        %1626 = vrot.lane.b32.xlu0 %v1619, 112
        %v1627 = vpop.permute.xlu0 %1626
        %1628 = vrot.lane.b32.xlu0 %v1620, 112
        %v1629 = vpop.permute.xlu0 %1628
        %v1630 = vsel %vm946, %v1625, %v1627
        %v1631 = vsel %vm946, %v1627, %v1629
        %v1635 = vadd.f32 %v1611, %v1630
        %v1636 = vadd.f32 %v1612, %v1631
        %v1637 = vadd.f32 %v1613, %v1629
        %1638 = vset.pattern.permute.xlu0 18
        %1639 = vperm.xlu0 %1638, %v266
        %v1640 = vpop.permute.xlu0 %1639
        %v1642 = vmul.f32 %v1640, %v919
        %v1643 = vmul.f32 %v1640, %v915
        %v1644 = vmul.f32 %v1640, %v920
        %1648 = vrot.lane.b32.xlu0 %v1642, 96
        %v1649 = vpop.permute.xlu0 %1648
        %1650 = vrot.lane.b32.xlu0 %v1643, 96
        %v1651 = vpop.permute.xlu0 %1650
        %1652 = vrot.lane.b32.xlu0 %v1644, 96
        %v1653 = vpop.permute.xlu0 %1652
        %v1654 = vsel %vm969, %v1649, %v1651
        %v1655 = vsel %vm969, %v1651, %v1653
        %v1659 = vadd.f32 %v1635, %v1654
        %v1660 = vadd.f32 %v1636, %v1655
        %v1661 = vadd.f32 %v1637, %v1653
        %1662 = vset.pattern.permute.xlu0 25
        %1663 = vperm.xlu0 %1662, %v266
        %v1664 = vpop.permute.xlu0 %1663
        %v1666 = vmul.f32 %v1664, %v919
        %v1667 = vmul.f32 %v1664, %v915
        %v1668 = vmul.f32 %v1664, %v920
        %1672 = vrot.lane.b32.xlu0 %v1666, 80
        %v1673 = vpop.permute.xlu0 %1672
        %1674 = vrot.lane.b32.xlu0 %v1667, 80
        %v1675 = vpop.permute.xlu0 %1674
        %1676 = vrot.lane.b32.xlu0 %v1668, 80
        %v1677 = vpop.permute.xlu0 %1676
        %v1678 = vsel %vm992, %v1673, %v1675
        %v1679 = vsel %vm992, %v1675, %v1677
        %v1683 = vadd.f32 %v1659, %v1678
        %v1684 = vadd.f32 %v1660, %v1679
        %v1685 = vadd.f32 %v1661, %v1677
        %1686 = vset.pattern.permute.xlu0 32
        %1687 = vperm.xlu0 %1686, %v266
        %v1688 = vpop.permute.xlu0 %1687
        %v1690 = vmul.f32 %v1688, %v919
        %v1691 = vmul.f32 %v1688, %v915
        %v1692 = vmul.f32 %v1688, %v920
        %1696 = vrot.lane.b32.xlu0 %v1690, 64
        %v1697 = vpop.permute.xlu0 %1696
        %1698 = vrot.lane.b32.xlu0 %v1691, 64
        %v1699 = vpop.permute.xlu0 %1698
        %1700 = vrot.lane.b32.xlu0 %v1692, 64
        %v1701 = vpop.permute.xlu0 %1700
        %v1702 = vsel %vm1015, %v1697, %v1699
        %v1703 = vsel %vm1015, %v1699, %v1701
        %v1707 = vadd.f32 %v1683, %v1702
        %v1708 = vadd.f32 %v1684, %v1703
        %v1709 = vadd.f32 %v1685, %v1701
        %1710 = vset.pattern.permute.xlu0 39
        %1711 = vperm.xlu0 %1710, %v266
        %v1712 = vpop.permute.xlu0 %1711
        %v1714 = vmul.f32 %v1712, %v919
        %v1715 = vmul.f32 %v1712, %v915
        %v1716 = vmul.f32 %v1712, %v920
        %1720 = vrot.lane.b32.xlu0 %v1714, 48
        %v1721 = vpop.permute.xlu0 %1720
        %1722 = vrot.lane.b32.xlu0 %v1715, 48
        %v1723 = vpop.permute.xlu0 %1722
        %1724 = vrot.lane.b32.xlu0 %v1716, 48
        %v1725 = vpop.permute.xlu0 %1724
        %v1726 = vsel %vm1038, %v1721, %v1723
        %v1727 = vsel %vm1038, %v1723, %v1725
        %v1731 = vadd.f32 %v1707, %v1726
        %v1732 = vadd.f32 %v1708, %v1727
        %v1733 = vadd.f32 %v1709, %v1725
        %1734 = vset.pattern.permute.xlu0 46
        %1735 = vperm.xlu0 %1734, %v266
        %v1736 = vpop.permute.xlu0 %1735
        %v1738 = vmul.f32 %v1736, %v919
        %v1739 = vmul.f32 %v1736, %v915
        %v1740 = vmul.f32 %v1736, %v920
        %1744 = vrot.lane.b32.xlu0 %v1738, 32
        %v1745 = vpop.permute.xlu0 %1744
        %1746 = vrot.lane.b32.xlu0 %v1739, 32
        %v1747 = vpop.permute.xlu0 %1746
        %1748 = vrot.lane.b32.xlu0 %v1740, 32
        %v1749 = vpop.permute.xlu0 %1748
        %v1750 = vsel %vm1061, %v1745, %v1747
        %v1751 = vsel %vm1061, %v1747, %v1749
        %v1755 = vadd.f32 %v1731, %v1750
        %v1756 = vadd.f32 %v1732, %v1751
        %v1757 = vadd.f32 %v1733, %v1749
        %v1758 = vsel %vm248, 1, 0
        %v1759 = vsel %vm249, 1, 0
        %vm1760 = vcmp.eq.s32.totalorder %v1758, 1
        %vm1761 = vcmp.eq.s32.totalorder %v1759, 1
        %1765 = vrot.lane.b32.xlu0 %v1755, 124
        %v1766 = vpop.permute.xlu0 %1765
        %1767 = vrot.lane.b32.xlu0 %v1756, 124
        %v1768 = vpop.permute.xlu0 %1767
        %1769 = vrot.lane.b32.xlu0 %v1757, 124
        %v1770 = vpop.permute.xlu0 %1769
        %vm1771 = vcmask 1014784
        %v1772 = vsel %vm1771, %v1766, %v1768
        %v1773 = vsel %vm1771, %v1768, %v1770
        %v1776 = vsel %vm1760, %v1772, 0.0
        %v1777 = vsel %vm1761, %v1773, 0.0
        %v1778 = vadd.f32 %v1602, %v1776
        %v1779 = vadd.f32 %v1603, %v1777
        %1780 = vset.pattern.permute.xlu0 5
        %1781 = vperm.xlu0 %1780, %v266
        %v1782 = vpop.permute.xlu0 %1781
        %v1784 = vmul.f32 %v1782, %v919
        %v1785 = vmul.f32 %v1782, %v915
        %v1786 = vmul.f32 %v1782, %v920
        %v1787 = vadd.f32 %v1784, 0.0
        %v1788 = vadd.f32 %v1785, 0.0
        %v1789 = vadd.f32 %v1786, 0.0
        %1790 = vset.pattern.permute.xlu0 12
        %1791 = vperm.xlu0 %1790, %v266
        %v1792 = vpop.permute.xlu0 %1791
        %v1794 = vmul.f32 %v1792, %v919
        %v1795 = vmul.f32 %v1792, %v915
        %v1796 = vmul.f32 %v1792, %v920
        %1800 = vrot.lane.b32.xlu0 %v1794, 112
        %v1801 = vpop.permute.xlu0 %1800
        %1802 = vrot.lane.b32.xlu0 %v1795, 112
        %v1803 = vpop.permute.xlu0 %1802
        %1804 = vrot.lane.b32.xlu0 %v1796, 112
        %v1805 = vpop.permute.xlu0 %1804
        %v1806 = vsel %vm946, %v1801, %v1803
        %v1807 = vsel %vm946, %v1803, %v1805
        %v1811 = vadd.f32 %v1787, %v1806
        %v1812 = vadd.f32 %v1788, %v1807
        %v1813 = vadd.f32 %v1789, %v1805
        %1814 = vset.pattern.permute.xlu0 19
        %1815 = vperm.xlu0 %1814, %v266
        %v1816 = vpop.permute.xlu0 %1815
        %v1818 = vmul.f32 %v1816, %v919
        %v1819 = vmul.f32 %v1816, %v915
        %v1820 = vmul.f32 %v1816, %v920
        %1824 = vrot.lane.b32.xlu0 %v1818, 96
        %v1825 = vpop.permute.xlu0 %1824
        %1826 = vrot.lane.b32.xlu0 %v1819, 96
        %v1827 = vpop.permute.xlu0 %1826
        %1828 = vrot.lane.b32.xlu0 %v1820, 96
        %v1829 = vpop.permute.xlu0 %1828
        %v1830 = vsel %vm969, %v1825, %v1827
        %v1831 = vsel %vm969, %v1827, %v1829
        %v1835 = vadd.f32 %v1811, %v1830
        %v1836 = vadd.f32 %v1812, %v1831
        %v1837 = vadd.f32 %v1813, %v1829
        %1838 = vset.pattern.permute.xlu0 26
        %1839 = vperm.xlu0 %1838, %v266
        %v1840 = vpop.permute.xlu0 %1839
        %v1842 = vmul.f32 %v1840, %v919
        %v1843 = vmul.f32 %v1840, %v915
        %v1844 = vmul.f32 %v1840, %v920
        %1848 = vrot.lane.b32.xlu0 %v1842, 80
        %v1849 = vpop.permute.xlu0 %1848
        %1850 = vrot.lane.b32.xlu0 %v1843, 80
        %v1851 = vpop.permute.xlu0 %1850
        %1852 = vrot.lane.b32.xlu0 %v1844, 80
        %v1853 = vpop.permute.xlu0 %1852
        %v1854 = vsel %vm992, %v1849, %v1851
        %v1855 = vsel %vm992, %v1851, %v1853
        %v1859 = vadd.f32 %v1835, %v1854
        %v1860 = vadd.f32 %v1836, %v1855
        %v1861 = vadd.f32 %v1837, %v1853
        %1862 = vset.pattern.permute.xlu0 33
        %1863 = vperm.xlu0 %1862, %v266
        %v1864 = vpop.permute.xlu0 %1863
        %v1866 = vmul.f32 %v1864, %v919
        %v1867 = vmul.f32 %v1864, %v915
        %v1868 = vmul.f32 %v1864, %v920
        %1872 = vrot.lane.b32.xlu0 %v1866, 64
        %v1873 = vpop.permute.xlu0 %1872
        %1874 = vrot.lane.b32.xlu0 %v1867, 64
        %v1875 = vpop.permute.xlu0 %1874
        %1876 = vrot.lane.b32.xlu0 %v1868, 64
        %v1877 = vpop.permute.xlu0 %1876
        %v1878 = vsel %vm1015, %v1873, %v1875
        %v1879 = vsel %vm1015, %v1875, %v1877
        %v1883 = vadd.f32 %v1859, %v1878
        %v1884 = vadd.f32 %v1860, %v1879
        %v1885 = vadd.f32 %v1861, %v1877
        %1886 = vset.pattern.permute.xlu0 40
        %1887 = vperm.xlu0 %1886, %v266
        %v1888 = vpop.permute.xlu0 %1887
        %v1890 = vmul.f32 %v1888, %v919
        %v1891 = vmul.f32 %v1888, %v915
        %v1892 = vmul.f32 %v1888, %v920
        %1896 = vrot.lane.b32.xlu0 %v1890, 48
        %v1897 = vpop.permute.xlu0 %1896
        %1898 = vrot.lane.b32.xlu0 %v1891, 48
        %v1899 = vpop.permute.xlu0 %1898
        %1900 = vrot.lane.b32.xlu0 %v1892, 48
        %v1901 = vpop.permute.xlu0 %1900
        %v1902 = vsel %vm1038, %v1897, %v1899
        %v1903 = vsel %vm1038, %v1899, %v1901
        %v1907 = vadd.f32 %v1883, %v1902
        %v1908 = vadd.f32 %v1884, %v1903
        %v1909 = vadd.f32 %v1885, %v1901
        %1910 = vset.pattern.permute.xlu0 47
        %1911 = vperm.xlu0 %1910, %v266
        %v1912 = vpop.permute.xlu0 %1911
        %v1914 = vmul.f32 %v1912, %v919
        %v1915 = vmul.f32 %v1912, %v915
        %v1916 = vmul.f32 %v1912, %v920
        %1920 = vrot.lane.b32.xlu0 %v1914, 32
        %v1921 = vpop.permute.xlu0 %1920
        %1922 = vrot.lane.b32.xlu0 %v1915, 32
        %v1923 = vpop.permute.xlu0 %1922
        %1924 = vrot.lane.b32.xlu0 %v1916, 32
        %v1925 = vpop.permute.xlu0 %1924
        %v1926 = vsel %vm1061, %v1921, %v1923
        %v1927 = vsel %vm1061, %v1923, %v1925
        %v1931 = vadd.f32 %v1907, %v1926
        %v1932 = vadd.f32 %v1908, %v1927
        %v1933 = vadd.f32 %v1909, %v1925
        %v1934 = vsel %vm256, 1, 0
        %v1935 = vsel %vm257, 1, 0
        %vm1936 = vcmp.eq.s32.totalorder %v1934, 1
        %vm1937 = vcmp.eq.s32.totalorder %v1935, 1
        %1941 = vrot.lane.b32.xlu0 %v1931, 123
        %v1942 = vpop.permute.xlu0 %1941
        %1943 = vrot.lane.b32.xlu0 %v1932, 123
        %v1944 = vpop.permute.xlu0 %1943
        %1945 = vrot.lane.b32.xlu0 %v1933, 123
        %v1946 = vpop.permute.xlu0 %1945
        %vm1947 = vcmask 1006592
        %v1948 = vsel %vm1947, %v1942, %v1944
        %v1949 = vsel %vm1947, %v1944, %v1946
        %v1952 = vsel %vm1936, %v1948, 0.0
        %v1953 = vsel %vm1937, %v1949, 0.0
        %v1954 = vadd.f32 %v1778, %v1952
        %v1955 = vadd.f32 %v1779, %v1953
        %1956 = vset.pattern.permute.xlu0 6
        %1957 = vperm.xlu0 %1956, %v266
        %v1958 = vpop.permute.xlu0 %1957
        %v1960 = vmul.f32 %v1958, %v919
        %v1961 = vmul.f32 %v1958, %v915
        %v1962 = vmul.f32 %v1958, %v920
        %v1963 = vadd.f32 %v1960, 0.0
        %v1964 = vadd.f32 %v1961, 0.0
        %v1965 = vadd.f32 %v1962, 0.0
        %1966 = vset.pattern.permute.xlu0 13
        %1967 = vperm.xlu0 %1966, %v266
        %v1968 = vpop.permute.xlu0 %1967
        %v1970 = vmul.f32 %v1968, %v919
        %v1971 = vmul.f32 %v1968, %v915
        %v1972 = vmul.f32 %v1968, %v920
        %1976 = vrot.lane.b32.xlu0 %v1970, 112
        %v1977 = vpop.permute.xlu0 %1976
        %1978 = vrot.lane.b32.xlu0 %v1971, 112
        %v1979 = vpop.permute.xlu0 %1978
        %1980 = vrot.lane.b32.xlu0 %v1972, 112
        %v1981 = vpop.permute.xlu0 %1980
        %v1982 = vsel %vm946, %v1977, %v1979
        %v1983 = vsel %vm946, %v1979, %v1981
        %v1987 = vadd.f32 %v1963, %v1982
        %v1988 = vadd.f32 %v1964, %v1983
        %v1989 = vadd.f32 %v1965, %v1981
        %1990 = vset.pattern.permute.xlu0 20
        %1991 = vperm.xlu0 %1990, %v266
        %v1992 = vpop.permute.xlu0 %1991
        %v1994 = vmul.f32 %v1992, %v919
        %v1995 = vmul.f32 %v1992, %v915
        %v1996 = vmul.f32 %v1992, %v920
        %2000 = vrot.lane.b32.xlu0 %v1994, 96
        %v2001 = vpop.permute.xlu0 %2000
        %2002 = vrot.lane.b32.xlu0 %v1995, 96
        %v2003 = vpop.permute.xlu0 %2002
        %2004 = vrot.lane.b32.xlu0 %v1996, 96
        %v2005 = vpop.permute.xlu0 %2004
        %v2006 = vsel %vm969, %v2001, %v2003
        %v2007 = vsel %vm969, %v2003, %v2005
        %v2011 = vadd.f32 %v1987, %v2006
        %v2012 = vadd.f32 %v1988, %v2007
        %v2013 = vadd.f32 %v1989, %v2005
        %2014 = vset.pattern.permute.xlu0 27
        %2015 = vperm.xlu0 %2014, %v266
        %v2016 = vpop.permute.xlu0 %2015
        %v2018 = vmul.f32 %v2016, %v919
        %v2019 = vmul.f32 %v2016, %v915
        %v2020 = vmul.f32 %v2016, %v920
        %2024 = vrot.lane.b32.xlu0 %v2018, 80
        %v2025 = vpop.permute.xlu0 %2024
        %2026 = vrot.lane.b32.xlu0 %v2019, 80
        %v2027 = vpop.permute.xlu0 %2026
        %2028 = vrot.lane.b32.xlu0 %v2020, 80
        %v2029 = vpop.permute.xlu0 %2028
        %v2030 = vsel %vm992, %v2025, %v2027
        %v2031 = vsel %vm992, %v2027, %v2029
        %v2035 = vadd.f32 %v2011, %v2030
        %v2036 = vadd.f32 %v2012, %v2031
        %v2037 = vadd.f32 %v2013, %v2029
        %2038 = vset.pattern.permute.xlu0 34
        %2039 = vperm.xlu0 %2038, %v266
        %v2040 = vpop.permute.xlu0 %2039
        %v2042 = vmul.f32 %v2040, %v919
        %v2043 = vmul.f32 %v2040, %v915
        %v2044 = vmul.f32 %v2040, %v920
        %2048 = vrot.lane.b32.xlu0 %v2042, 64
        %v2049 = vpop.permute.xlu0 %2048
        %2050 = vrot.lane.b32.xlu0 %v2043, 64
        %v2051 = vpop.permute.xlu0 %2050
        %2052 = vrot.lane.b32.xlu0 %v2044, 64
        %v2053 = vpop.permute.xlu0 %2052
        %v2054 = vsel %vm1015, %v2049, %v2051
        %v2055 = vsel %vm1015, %v2051, %v2053
        %v2059 = vadd.f32 %v2035, %v2054
        %v2060 = vadd.f32 %v2036, %v2055
        %v2061 = vadd.f32 %v2037, %v2053
        %2062 = vset.pattern.permute.xlu0 41
        %2063 = vperm.xlu0 %2062, %v266
        %v2064 = vpop.permute.xlu0 %2063
        %v2066 = vmul.f32 %v2064, %v919
        %v2067 = vmul.f32 %v2064, %v915
        %v2068 = vmul.f32 %v2064, %v920
        %2072 = vrot.lane.b32.xlu0 %v2066, 48
        %v2073 = vpop.permute.xlu0 %2072
        %2074 = vrot.lane.b32.xlu0 %v2067, 48
        %v2075 = vpop.permute.xlu0 %2074
        %2076 = vrot.lane.b32.xlu0 %v2068, 48
        %v2077 = vpop.permute.xlu0 %2076
        %v2078 = vsel %vm1038, %v2073, %v2075
        %v2079 = vsel %vm1038, %v2075, %v2077
        %v2083 = vadd.f32 %v2059, %v2078
        %v2084 = vadd.f32 %v2060, %v2079
        %v2085 = vadd.f32 %v2061, %v2077
        %2086 = vset.pattern.permute.xlu0 48
        %2087 = vperm.xlu0 %2086, %v266
        %v2088 = vpop.permute.xlu0 %2087
        %v2090 = vmul.f32 %v2088, %v919
        %v2091 = vmul.f32 %v2088, %v915
        %v2092 = vmul.f32 %v2088, %v920
        %2096 = vrot.lane.b32.xlu0 %v2090, 32
        %v2097 = vpop.permute.xlu0 %2096
        %2098 = vrot.lane.b32.xlu0 %v2091, 32
        %v2099 = vpop.permute.xlu0 %2098
        %2100 = vrot.lane.b32.xlu0 %v2092, 32
        %v2101 = vpop.permute.xlu0 %2100
        %v2102 = vsel %vm1061, %v2097, %v2099
        %v2103 = vsel %vm1061, %v2099, %v2101
        %v2107 = vadd.f32 %v2083, %v2102
        %v2108 = vadd.f32 %v2084, %v2103
        %v2109 = vadd.f32 %v2085, %v2101
        %v2110 = vsel %vm264, 1, 0
        %v2111 = vsel %vm265, 1, 0
        %vm2112 = vcmp.eq.s32.totalorder %v2110, 1
        %vm2113 = vcmp.eq.s32.totalorder %v2111, 1
        %2117 = vrot.lane.b32.xlu0 %v2107, 122
        %v2118 = vpop.permute.xlu0 %2117
        %2119 = vrot.lane.b32.xlu0 %v2108, 122
        %v2120 = vpop.permute.xlu0 %2119
        %2121 = vrot.lane.b32.xlu0 %v2109, 122
        %v2122 = vpop.permute.xlu0 %2121
        %vm2123 = vcmask 998400
        %v2124 = vsel %vm2123, %v2118, %v2120
        %v2125 = vsel %vm2123, %v2120, %v2122
        %v2128 = vsel %vm2112, %v2124, 0.0
        %v2129 = vsel %vm2113, %v2125, 0.0
        %v2130 = vadd.f32 %v1954, %v2128
        %v2131 = vadd.f32 %v1955, %v2129
        %vm2132 = vcmask 1041408
        %v2133 = vsel %vm2132, %v2130, 0.0
        %v2134 = vrot.slane %v2133, 4
        %v2135 = vadd.f32 %v2133, %v2134
        %v2136 = vrot.slane %v2135, 2
        %v2137 = vadd.f32 %v2135, %v2136
        %v2138 = vrot.slane %v2137, 1
        %v2139 = vadd.f32 %v2137, %v2138
        %v2140 = vsel %vm2132, %v2131, 0.0
        %v2141 = vrot.slane %v2140, 4
        %v2142 = vadd.f32 %v2140, %v2141
        %v2143 = vrot.slane %v2142, 2
        %v2144 = vadd.f32 %v2142, %v2143
        %v2145 = vrot.slane %v2144, 1
        %v2146 = vadd.f32 %v2144, %v2145
        %v2147 = vxor.u32 %v2139, 2147483648
        %v2148 = vxor.u32 %v2146, 2147483648
        %v2149 = vmul.f32 %v2147, 1.442695
        %v2150 = vpow.pop %v2149
        %v2151 = vmul.f32 %v2148, 1.442695
        %v2152 = vpow.pop %v2151
        %v2153 = vadd.f32 %v2150, 1.0
        %v2154 = vadd.f32 %v2152, 1.0
        %v2155 = vrcp.pop %v2153
        %v2156 = vmul.f32 %v2153, %v2155
        %v2157 = vsub.f32 1.0, %v2156
        %v2158 = vmul.f32 %v2155, %v2157
        %v2159 = vadd.f32 %v2155, %v2158
        %vm2160 = vweird.f32 %v2153
        %vm2161 = vweird.f32 %v2155
        %vm2162 = vmor %vm2160, %vm2161
        %v2163 = vsel %vm2162, %v2155, %v2159
        %v2164 = vand.u32 2147483647, %v2153
        %vm2165 = vcmp.eq.f32.partialorder %v2164, 8.507059e+37
        %v2166 = vand.u32 %v2153, 2147483648
        %v2167 = vor.u32 1.1754944e-38, %v2166
        %v2168 = vsel %vm2165, %v2167, %v2163
        %v2169 = vmul.f32 1.0, %v2168
        %v2170 = vrcp.pop %v2154
        %v2171 = vmul.f32 %v2154, %v2170
        %v2172 = vsub.f32 1.0, %v2171
        %v2173 = vmul.f32 %v2170, %v2172
        %v2174 = vadd.f32 %v2170, %v2173
        %vm2175 = vweird.f32 %v2154
        %vm2176 = vweird.f32 %v2170
        %vm2177 = vmor %vm2175, %vm2176
        %v2178 = vsel %vm2177, %v2170, %v2174
        %v2179 = vand.u32 2147483647, %v2154
        %vm2180 = vcmp.eq.f32.partialorder %v2179, 8.507059e+37
        %v2181 = vand.u32 %v2154, 2147483648
        %v2182 = vor.u32 1.1754944e-38, %v2181
        %v2183 = vsel %vm2180, %v2182, %v2178
        %v2184 = vmul.f32 1.0, %v2183
        %v2185 = vmul.f32 %v594, %v2169
        %v2186 = vmul.f32 %v595, %v2184
        %2187 = vst [vmem:[%s184] sm:$0xff] %v2185
        %2188 = vst [vmem:[%s184 + $0x8] sm:$0xff] %v2186
        %p2189 = scmp.lt.s32.totalorder %s15, 1
        %s2190 = scalar_select %p2189, %s15, 1
        %s2191 = smul.addr %s2190, 2
        %s2192 = smul.addr %s2191, 8
        %s2193 = scalar_lea.vmem %s3, %s2192
        // Predicated region
        $region37: #{ecbam_forward.1} parent=31 // pred_check
          %p2194 = pneg %p101
        $region38: #{ecbam_forward.1} parent=31 // pred_check_branch
          %2196 = sbr.rel (%p2194) target = $region40
        $region39: #{ecbam_forward.1} parent=31 // pred_region
          _
        $region40: #{ecbam_forward.1} parent=31 // pred_fallthru
          _
      $region32: #{ecbam_forward.1} parent=5 // pred_fallthru
        _
      %p2197 = scmp.le.s32.totalorder 2, %s10
      // Predicated region
      $region41: #{ecbam_forward.1} parent=5 // pred_check
        %p2198 = pneg %p2197
      $region42: #{ecbam_forward.1} parent=5 // pred_check_branch
        %2200 = sbr.rel (%p2198) target = $region44
      $region43: #{ecbam_forward.1} parent=5 // pred_region
        %s2201 = ssub.s32 %s10, 2
        // Predicated region
        $region45: #{ecbam_forward.1} parent=43 // pred_check
          %p2202 = pneg %p107
        $region46: #{ecbam_forward.1} parent=43 // pred_check_branch
          %2204 = sbr.rel (%p2202) target = $region48
        $region47: #{ecbam_forward.1} parent=43 // pred_region
          %p2205 = scmp.lt.s32.totalorder %s16, 1
          %s2206 = scalar_select %p2205, %s16, 1
          %s2207 = smul.addr %s2206, 2
          %s2208 = smul.addr %s2207, 8
          %s2209 = scalar_lea.vmem %s3, %s2208
        $region48: #{ecbam_forward.1} parent=43 // pred_fallthru
          _
      $region44: #{ecbam_forward.1} parent=5 // pred_fallthru
        _
    $region6: #{ecbam_forward.1} parent=1 // loop_footer
      %s14 = sadd.s32 1, %s10
    $region7: #{ecbam_forward.1} parent=1 // loop_footer_branch
      %9 = sbr.rel target = $region3
    $region8: #{ecbam_forward.1} parent=1 // loop_exit
      _
    %2210 = vsyncpa [#allocation3], 1
    %s2211 = scalar_lea.sflag [#allocation3], 1
    %2212 = vsyncpa %s2211, 1

</llo_original>
